<compile_context>
chip_gen: v7x
topology: tpu7x:2x2x1
jax: 0.10.0
libtpu: 0.0.40
codegen_flags: <defaults>
</compile_context>

<pallas_src>
import jax
import jax.numpy as jnp
import numpy as np
from jax.experimental import pallas as pl
from jax.experimental.pallas import tpu as pltpu


def ode_kernel(t_ref, x_ref, w1x_ref, w1t_ref, b1_ref, w2_ref, b2_ref, out_ref):
    t = t_ref[0]                                   # scalar time (SMEM)
    x = x_ref[...]                                 # (bn, 2H) f32 tile
    _, d = x.shape
    half = d // 2

    # --- dstate_net(t, tpp_state): time-dependent MLP (MXU hot path) -------
    bias = t * w1t_ref[...] + b1_ref[...]          # (1, DH) f32, hoisted

    # bf16 operands on the MXU, f32 accumulation; elementwise stays f32.
    h1 = jnp.tanh(
        jnp.dot(x.astype(jnp.bfloat16), w1x_ref[...],
                preferred_element_type=jnp.float32)
        + bias
    )                                              # (bn, DH) f32
    dstate = (
        jnp.dot(h1.astype(jnp.bfloat16), w2_ref[...],
                preferred_element_type=jnp.float32)
        + b2_ref[...]
    )                                              # (bn, 2H) f32

    # --- SplitHiddenStateODEFunc.forward body (full-width, lane-masked) ----
    # Lanes [0, H) carry c / dcdt, lanes [H, 2H) carry h / dhdt.
    lane = jax.lax.broadcasted_iota(jnp.int32, (1, d), dimension=1)
    is_c = lane < half                             # (1, d) mask, broadcast below

    # Gram-Schmidt projection of dcdt against c: one masked copy of x reused
    # for both full-width reductions.
    xc = jnp.where(is_c, x, 0.0)
    num = jnp.sum(dstate * xc, axis=-1, keepdims=True)
    den = jnp.sum(xc * xc, axis=-1, keepdims=True) + 1e-12
    inv = pl.reciprocal(den, approx=True)          # EUP slot (VALU-free)
    inv = inv * (2.0 - den * inv)                  # one NR step -> ~f32 accuracy

    dc_full = dstate - (num * inv) * x             # valid on c lanes
    # softplus also runs on the (unused) c lanes; harmless EUP slack.
    dh_full = -jax.nn.softplus(dstate) * x         # valid on h lanes

    out_ref[...] = jnp.where(is_c, dc_full, dh_full).astype(out_ref.dtype)


def _round_up(x, m):
    return (x + m - 1) // m * m


def prepare_params(params):
    """One-time weight prep (call once per ODE solve, not per derivative eval):
    MXU operands to bf16, biases stay f32."""
    w1x, w1t, b1, w2, b2 = params
    return (w1x.astype(jnp.bfloat16),
            w1t.astype(jnp.float32),
            b1.astype(jnp.float32),
            w2.astype(jnp.bfloat16),
            b2.astype(jnp.float32))


def split_hidden_state_odefunc(t, tpp_state, params, *, block_n=1024):
    """Pallas forward of SplitHiddenStateODEFunc with a concrete MLP dstate_net.

    `params` should come from prepare_params() (bf16 MXU weights).  `block_n`
    is the row tile; 512-2048 amortizes per-grid-step overhead on all
    generations.  On v7x prefer block_n ~ ceil(N/2) so both TensorCores work.
    """
    w1x, w1t, b1, w2, b2 = params
    n, d = tpp_state.shape
    dh = w1x.shape[1]

    # Effective row tile: multiple of 8 sublanes, clamped to the batch size.
    bn = min(_round_up(block_n, 8), _round_up(n, 8))
    grid = pl.cdiv(n, bn)          # ragged last block handled by Pallas; no pad

    t_arr = jnp.reshape(jnp.asarray(t, jnp.float32), (1,))
    resident = dict(pipeline_mode=pl.Buffered(1))  # constant-index weights

    return pl.pallas_call(
        ode_kernel,
        out_shape=jax.ShapeDtypeStruct((n, d), tpp_state.dtype),
        grid_spec=pltpu.PrefetchScalarGridSpec(
            num_scalar_prefetch=0,
            grid=(grid,),
            in_specs=[
                pl.BlockSpec(memory_space=pltpu.MemorySpace.SMEM),        # t
                pl.BlockSpec((bn, d), lambda i: (i, 0)),                  # state
                pl.BlockSpec((d, dh), lambda i: (0, 0), **resident),      # w1x
                pl.BlockSpec((1, dh), lambda i: (0, 0), **resident),      # w1t
                pl.BlockSpec((1, dh), lambda i: (0, 0), **resident),      # b1
                pl.BlockSpec((dh, d), lambda i: (0, 0), **resident),      # w2
                pl.BlockSpec((1, d), lambda i: (0, 0), **resident),       # b2
            ],
            out_specs=pl.BlockSpec((bn, d), lambda i: (i, 0)),
        ),
        compiler_params=pltpu.CompilerParams(
            # v7x: switch to pltpu.CORE_PARALLEL (with grid >= 2) to shard the
            # batch axis across both TensorCores.
            dimension_semantics=("parallel",),
            vmem_limit_bytes=32 * 1024 * 1024,     # v7x-safe scoped budget
        ),
    )(t_arr, tpp_state, w1x, w1t, b1, w2, b2)


def reference(t, tpp_state, params):
    """Pure-JAX reference mirroring the PyTorch forward.

    The dstate_net matmuls mirror the kernel's MXU precision (bf16 operands,
    f32 accumulation); the SplitHiddenStateODEFunc body itself is exact f32.
    """
    w1x, w1t, b1, w2, b2 = params
    h1 = jnp.tanh(
        jnp.dot(tpp_state.astype(jnp.bfloat16), w1x.astype(jnp.bfloat16),
                preferred_element_type=jnp.float32)
        + t * w1t + b1
    )
    dstate = jnp.dot(h1.astype(jnp.bfloat16), w2.astype(jnp.bfloat16),
                     preferred_element_type=jnp.float32) + b2
    H = tpp_state.shape[1] // 2
    c, h = tpp_state[:, :H], tpp_state[:, H:]
    dcdt, dhdt = dstate[:, :H], dstate[:, H:]
    dcdt = dcdt - (dcdt * c).sum(-1, keepdims=True) / (c * c).sum(-1, keepdims=True) * c
    dhdt = -jax.nn.softplus(dhdt) * h
    return jnp.concatenate([dcdt, dhdt], axis=1)


if __name__ == "__main__":
    H = 64       # hidden size per half -> tpp_state width 2H = 128 (lane-dense)
    D = 2 * H
    DH = 128     # MLP hidden width (use 256 on v6e/v7x if model capacity wants it)
    N = 200      # batch of events; deliberately NOT a tile multiple (ragged path)

    key = jax.random.PRNGKey(0)
    k_x, k_w1, k_t, k_b1, k_w2, k_b2 = jax.random.split(key, 6)

    tpp_state = jax.random.normal(k_x, (N, D), jnp.float32)
    t = jnp.float32(0.37)

    w1x = jax.random.normal(k_w1, (D, DH), jnp.float32) / jnp.sqrt(D + 1.0)
    w1t = jax.random.normal(k_t, (1, DH), jnp.float32) / jnp.sqrt(D + 1.0)
    b1 = jax.random.normal(k_b1, (1, DH), jnp.float32) * 0.01
    w2 = jax.random.normal(k_w2, (DH, D), jnp.float32) / jnp.sqrt(float(DH))
    b2 = jax.random.normal(k_b2, (1, D), jnp.float32) * 0.01
    raw_params = (w1x, w1t, b1, w2, b2)
    params = prepare_params(raw_params)          # bf16 weight cast, done once

    ref = jax.block_until_ready(reference(t, tpp_state, raw_params))

    # 1) Default large tile (clamped to the batch): single grid step.
    out = jax.block_until_ready(split_hidden_state_odefunc(t, tpp_state, params))
    # Tolerance covers the EUP approx-reciprocal (+ Newton step) and minor
    # tanh/softplus/bf16-rounding deltas between Mosaic and XLA.
    np.testing.assert_allclose(np.asarray(out), np.asarray(ref),
                               rtol=1e-3, atol=1e-3)

    # 2) Small tile forcing a multi-step grid with a ragged last block
    #    (exercises the no-pad / dropped-OOB-row path).
    out2 = jax.block_until_ready(
        split_hidden_state_odefunc(t, tpp_state, params, block_n=64))
    np.testing.assert_allclose(np.asarray(out2), np.asarray(ref),
                               rtol=1e-3, atol=1e-3)

    print("KERNEL_OK")
</pallas_src>

<mosaic_0001>
module attributes {stable_mosaic.version = 11 : i64} {
  func.func @ode_kernel(%arg0: i32, %arg1: memref<1xf32, #tpu.memory_space<smem>>, %arg2: memref<200x128xf32, #tpu.memory_space<vmem>>, %arg3: memref<128x128xbf16, #tpu.memory_space<vmem>>, %arg4: memref<1x128xf32, #tpu.memory_space<vmem>>, %arg5: memref<1x128xf32, #tpu.memory_space<vmem>>, %arg6: memref<128x128xbf16, #tpu.memory_space<vmem>>, %arg7: memref<1x128xf32, #tpu.memory_space<vmem>>, %arg8: memref<200x128xf32, #tpu.memory_space<vmem>>) attributes {dimension_semantics = [#tpu.dimension_semantics<parallel>], iteration_bounds = array<i64: 1>, scalar_prefetch = 0 : i64, scratch_operands = 0 : i64, tpu.core_type = #tpu.core_type<tc>, window_params = [{transform_indices = @transform_0, window_bounds = array<i64: 1>}, {transform_indices = @transform_1, window_bounds = array<i64: 200, 128>}, {pipeline_mode = #tpu.pipeline_mode<synchronous>, transform_indices = @transform_2, window_bounds = array<i64: 128, 128>}, {pipeline_mode = #tpu.pipeline_mode<synchronous>, transform_indices = @transform_3, window_bounds = array<i64: 1, 128>}, {pipeline_mode = #tpu.pipeline_mode<synchronous>, transform_indices = @transform_4, window_bounds = array<i64: 1, 128>}, {pipeline_mode = #tpu.pipeline_mode<synchronous>, transform_indices = @transform_5, window_bounds = array<i64: 128, 128>}, {pipeline_mode = #tpu.pipeline_mode<synchronous>, transform_indices = @transform_6, window_bounds = array<i64: 1, 128>}, {transform_indices = @transform_7, window_bounds = array<i64: 200, 128>}]} {
    %c0 = arith.constant 0 : index
    %0 = memref.load %arg1[%c0] : memref<1xf32, #tpu.memory_space<smem>>
    %c0_0 = arith.constant 0 : index
    %c0_1 = arith.constant 0 : index
    %1 = vector.load %arg2[%c0_0, %c0_1] : memref<200x128xf32, #tpu.memory_space<vmem>>, vector<200x128xf32>
    %c0_2 = arith.constant 0 : index
    %c0_3 = arith.constant 0 : index
    %2 = vector.load %arg4[%c0_2, %c0_3] : memref<1x128xf32, #tpu.memory_space<vmem>>, vector<1x128xf32>
    %3 = vector.broadcast %0 : f32 to vector<1x128xf32>
    %4 = arith.mulf %3, %2 : vector<1x128xf32>
    %c0_4 = arith.constant 0 : index
    %c0_5 = arith.constant 0 : index
    %5 = vector.load %arg5[%c0_4, %c0_5] : memref<1x128xf32, #tpu.memory_space<vmem>>, vector<1x128xf32>
    %6 = arith.addf %4, %5 : vector<1x128xf32>
    %7 = arith.truncf %1 : vector<200x128xf32> to vector<200x128xbf16>
    %c0_6 = arith.constant 0 : index
    %c0_7 = arith.constant 0 : index
    %8 = vector.load %arg3[%c0_6, %c0_7] : memref<128x128xbf16, #tpu.memory_space<vmem>>, vector<128x128xbf16>
    %cst = arith.constant dense<0.000000e+00> : vector<200x128xf32>
    %9 = tpu.matmul %7, %8, %cst {dimension_numbers = #tpu.dot_dimension_numbers<[1], [0], [0], [1], [0, 0, 1, 1], [], []>} : vector<200x128xbf16>, vector<128x128xbf16>, vector<200x128xf32> -> vector<200x128xf32>
    %10 = vector.broadcast %6 : vector<1x128xf32> to vector<200x128xf32>
    %11 = arith.addf %9, %10 : vector<200x128xf32>
    %12 = math.tanh %11 : vector<200x128xf32>
    %13 = arith.truncf %12 : vector<200x128xf32> to vector<200x128xbf16>
    %c0_8 = arith.constant 0 : index
    %c0_9 = arith.constant 0 : index
    %14 = vector.load %arg6[%c0_8, %c0_9] : memref<128x128xbf16, #tpu.memory_space<vmem>>, vector<128x128xbf16>
    %cst_10 = arith.constant dense<0.000000e+00> : vector<200x128xf32>
    %15 = tpu.matmul %13, %14, %cst_10 {dimension_numbers = #tpu.dot_dimension_numbers<[1], [0], [0], [1], [0, 0, 1, 1], [], []>} : vector<200x128xbf16>, vector<128x128xbf16>, vector<200x128xf32> -> vector<200x128xf32>
    %c0_11 = arith.constant 0 : index
    %c0_12 = arith.constant 0 : index
    %16 = vector.load %arg7[%c0_11, %c0_12] : memref<1x128xf32, #tpu.memory_space<vmem>>, vector<1x128xf32>
    %17 = vector.broadcast %16 : vector<1x128xf32> to vector<200x128xf32>
    %18 = arith.addf %15, %17 : vector<200x128xf32>
    %19 = tpu.iota {dimensions = array<i32: 1>} : vector<1x128xi32>
    %c64_i32 = arith.constant 64 : i32
    %20 = vector.broadcast %c64_i32 : i32 to vector<1x128xi32>
    %21 = arith.cmpi slt, %19, %20 : vector<1x128xi32>
    %cst_13 = arith.constant 0.000000e+00 : f32
    %22 = vector.shape_cast %21 : vector<1x128xi1> to vector<1x128xi1>
    %23 = vector.broadcast %22 : vector<1x128xi1> to vector<200x128xi1>
    %24 = vector.broadcast %cst_13 : f32 to vector<200x128xf32>
    %25 = arith.select %23, %1, %24 : vector<200x128xi1>, vector<200x128xf32>
    %26 = arith.mulf %18, %25 : vector<200x128xf32>
    %cst_14 = arith.constant dense<0.000000e+00> : vector<200xf32>
    %27 = vector.multi_reduction <add>, %26, %cst_14 [1] : vector<200x128xf32> to vector<200xf32>
    %28 = vector.shape_cast %27 : vector<200xf32> to vector<200x1xf32>
    %29 = arith.mulf %25, %25 : vector<200x128xf32>
    %cst_15 = arith.constant dense<0.000000e+00> : vector<200xf32>
    %30 = vector.multi_reduction <add>, %29, %cst_15 [1] : vector<200x128xf32> to vector<200xf32>
    %31 = vector.shape_cast %30 : vector<200xf32> to vector<200x1xf32>
    %cst_16 = arith.constant 9.99999996E-13 : f32
    %32 = vector.broadcast %cst_16 : f32 to vector<200x1xf32>
    %33 = arith.addf %31, %32 : vector<200x1xf32>
    %34 = tpu.reciprocal %33 {approx = true} : vector<200x1xf32> -> vector<200x1xf32>
    %35 = arith.mulf %33, %34 : vector<200x1xf32>
    %cst_17 = arith.constant 2.000000e+00 : f32
    %36 = vector.broadcast %cst_17 : f32 to vector<200x1xf32>
    %37 = arith.subf %36, %35 : vector<200x1xf32>
    %38 = arith.mulf %34, %37 : vector<200x1xf32>
    %39 = arith.mulf %28, %38 : vector<200x1xf32>
    %40 = vector.broadcast %39 : vector<200x1xf32> to vector<200x128xf32>
    %41 = arith.mulf %40, %1 : vector<200x128xf32>
    %42 = arith.subf %18, %41 : vector<200x128xf32>
    %cst_18 = arith.constant 0.000000e+00 : f32
    %43 = vector.broadcast %cst_18 : f32 to vector<200x128xf32>
    %44 = arith.maximumf %18, %43 : vector<200x128xf32>
    %45 = vector.broadcast %cst_18 : f32 to vector<200x128xf32>
    %46 = arith.subf %18, %45 : vector<200x128xf32>
    %47 = arith.cmpf one, %46, %46 : vector<200x128xf32>
    %48 = vector.broadcast %cst_18 : f32 to vector<200x128xf32>
    %49 = arith.addf %18, %48 : vector<200x128xf32>
    %50 = math.absf %46 : vector<200x128xf32>
    %cst_19 = arith.constant 0.000000e+00 : f32
    %51 = vector.broadcast %cst_19 : f32 to vector<200x128xf32>
    %52 = arith.subf %51, %50 : vector<200x128xf32>
    %53 = math.exp %52 : vector<200x128xf32>
    %54 = math.log1p %53 : vector<200x128xf32>
    %55 = arith.addf %44, %54 : vector<200x128xf32>
    %56 = arith.select %47, %49, %55 : vector<200x128xi1>, vector<200x128xf32>
    %cst_20 = arith.constant 0.000000e+00 : f32
    %57 = vector.broadcast %cst_20 : f32 to vector<200x128xf32>
    %58 = arith.subf %57, %56 : vector<200x128xf32>
    %59 = arith.mulf %58, %1 : vector<200x128xf32>
    %60 = vector.shape_cast %21 : vector<1x128xi1> to vector<1x128xi1>
    %61 = vector.broadcast %60 : vector<1x128xi1> to vector<200x128xi1>
    %62 = arith.select %61, %42, %59 : vector<200x128xi1>, vector<200x128xf32>
    %c0_21 = arith.constant 0 : index
    %c0_22 = arith.constant 0 : index
    %63 = vector.load %arg8[%c0_21, %c0_22] : memref<200x128xf32, #tpu.memory_space<vmem>>, vector<200x128xf32>
    tpu.vector_store %arg8[%c0_21, %c0_22], %62 {strides = array<i32>} : memref<200x128xf32, #tpu.memory_space<vmem>>, vector<200x128xf32>,
    return
  }
  func.func @transform_0(%arg0: i32) -> i32 {
    %c0_i32 = arith.constant 0 : i32
    %c0_i32_0 = arith.constant 0 : i32
    return %c0_i32 : i32
  }
  func.func @transform_1(%arg0: i32) -> (i32, i32) {
    %c0_i32 = arith.constant 0 : i32
    %c0_i32_0 = arith.constant 0 : i32
    return %arg0, %c0_i32 : i32, i32
  }
  func.func @transform_2(%arg0: i32) -> (i32, i32) {
    %c0_i32 = arith.constant 0 : i32
    %c0_i32_0 = arith.constant 0 : i32
    %c0_i32_1 = arith.constant 0 : i32
    return %c0_i32, %c0_i32_0 : i32, i32
  }
  func.func @transform_3(%arg0: i32) -> (i32, i32) {
    %c0_i32 = arith.constant 0 : i32
    %c0_i32_0 = arith.constant 0 : i32
    %c0_i32_1 = arith.constant 0 : i32
    return %c0_i32, %c0_i32_0 : i32, i32
  }
  func.func @transform_4(%arg0: i32) -> (i32, i32) {
    %c0_i32 = arith.constant 0 : i32
    %c0_i32_0 = arith.constant 0 : i32
    %c0_i32_1 = arith.constant 0 : i32
    return %c0_i32, %c0_i32_0 : i32, i32
  }
  func.func @transform_5(%arg0: i32) -> (i32, i32) {
    %c0_i32 = arith.constant 0 : i32
    %c0_i32_0 = arith.constant 0 : i32
    %c0_i32_1 = arith.constant 0 : i32
    return %c0_i32, %c0_i32_0 : i32, i32
  }
  func.func @transform_6(%arg0: i32) -> (i32, i32) {
    %c0_i32 = arith.constant 0 : i32
    %c0_i32_0 = arith.constant 0 : i32
    %c0_i32_1 = arith.constant 0 : i32
    return %c0_i32, %c0_i32_0 : i32, i32
  }
  func.func @transform_7(%arg0: i32) -> (i32, i32) {
    %c0_i32 = arith.constant 0 : i32
    %c0_i32_0 = arith.constant 0 : i32
    return %arg0, %c0_i32 : i32, i32
  }
}

</mosaic_0001>

<llo_original>
// kernel: tpu_custom_call.1
$region0: #{tpu_custom_call.1}
  #allocation0 [shape = 'u32[]', space=smem, size = 0x4, offset = 0x4, fixed_abs, tag = 'smem constant byte address 0x4 - core index']
  #allocation1 [shape = 'u32[144,128]{1,0:T(1,128)}', space=vmem, size = 0x12000, scoped, tag = 'internal scratch']
  #allocation2 [shape = 'f32[1]{0:T(128)S(6)}', space=smem, size = 0x200, scoped, tag = 'scoped memory for tpu_custom_call.1']
  %s0 = inlined_call_operand.<no memory space> [shape: f32[1], index: 0, kind: input, shape index: {}]
  %s1 = inlined_call_operand.hbm [shape: f32[200,128], index: 1, kind: input, shape index: {}]
  %s2 = inlined_call_operand.hbm [shape: bf16[128,128], index: 2, kind: input, shape index: {}]
  %s3 = inlined_call_operand.vmem [shape: f32[1,128], index: 3, kind: input, shape index: {}]
  %s4 = inlined_call_operand.vmem [shape: f32[1,128], index: 4, kind: input, shape index: {}]
  %s5 = inlined_call_operand.hbm [shape: bf16[128,128], index: 5, kind: input, shape index: {}]
  %s6 = inlined_call_operand.vmem [shape: f32[1,128], index: 6, kind: input, shape index: {}]
  %s7 = inlined_call_operand.hbm [shape: f32[200,128], index: 7, kind: output, shape index: {}]
  %s8 = sld [smem:[#allocation0]]
  $region50: #{tpu_custom_call.1} parent=0
    _
  %s10 = ssub.s32 1, %s8
  %s11 = scalar_select 0, %s10, %s8
  %12 = sst [smem:[#allocation2]] %s0
  $region1: #{tpu_custom_call.1} parent=0
    #allocation3 [shape = 'u8[102400]{0}', space=vmem, size = 0x19000, scoped, tag = 'input window, operand 1, single buffered']
    #allocation4 [shape = 's32[1]{0}', space=sflag, size = 0x4, scoped, tag = 'scoped memory for tpu_custom_call.1']
    #allocation5 [shape = 's32[1]{0}', space=sflag, size = 0x4, scoped, tag = 'scoped memory for tpu_custom_call.1']
    #allocation6 [shape = 'u8[32768]{0}', space=vmem, size = 0x8000, scoped, tag = 'input window, operand 2, single buffered']
    #allocation7 [shape = 's32[1]{0}', space=sflag, size = 0x4, scoped, tag = 'scoped memory for tpu_custom_call.1']
    #allocation8 [shape = 'u8[32768]{0}', space=vmem, size = 0x8000, scoped, tag = 'input window, operand 5, single buffered']
    #allocation9 [shape = 'u8[102400]{0}', space=vmem, size = 0x19000, scoped, tag = 'output window, operand 0, single buffered']
    %13 = vsyncpa [#allocation4], 0
    %14 = vsyncpa [#allocation7], 0
    %15 = vsyncpa [#allocation5], 0
    // Predicated region
    $region2: #{tpu_custom_call.1} parent=1 // pred_check
      _
    $region3: #{tpu_custom_call.1} parent=1 // pred_check_branch
      %17 = sbr.rel (0) target = $region5
    $region4: #{tpu_custom_call.1} parent=1 // pred_region
      _
    $region5: #{tpu_custom_call.1} parent=1 // pred_fallthru
      _
    // Predicated region
    $region6: #{tpu_custom_call.1} parent=1 // pred_check
      _
    $region7: #{tpu_custom_call.1} parent=1 // pred_check_branch
      %19 = sbr.rel (0) target = $region9
    $region8: #{tpu_custom_call.1} parent=1 // pred_region
      %s21 = ssub.s32 3200, 3200
      %22 = vsyncadd [#allocation4], %s21
      %s23 = sshll.u32 [#allocation3], 4
      %s24 = int_to_ptr.vmem [resolvable:$true] %s23
      %29 = dma.hbm_to_vmem [thread:$0]  %s1, 3200, %s24, [#allocation4], 128, 128, 8
    $region9: #{tpu_custom_call.1} parent=1 // pred_fallthru
      _
    // Predicated region
    $region10: #{tpu_custom_call.1} parent=1 // pred_check
      _
    $region11: #{tpu_custom_call.1} parent=1 // pred_check_branch
      %31 = sbr.rel (0) target = $region13
    $region12: #{tpu_custom_call.1} parent=1 // pred_region
      %s33 = ssub.s32 1024, 1024
      %34 = vsyncadd [#allocation7], %s33
      %s35 = sshll.u32 [#allocation6], 4
      %s36 = int_to_ptr.vmem [resolvable:$true] %s35
      %41 = dma.hbm_to_vmem [thread:$0]  %s2, 1024, %s36, [#allocation7], 64, 64, 4
    $region13: #{tpu_custom_call.1} parent=1 // pred_fallthru
      _
    // Predicated region
    $region14: #{tpu_custom_call.1} parent=1 // pred_check
      _
    $region15: #{tpu_custom_call.1} parent=1 // pred_check_branch
      %43 = sbr.rel (0) target = $region17
    $region16: #{tpu_custom_call.1} parent=1 // pred_region
      _
    $region17: #{tpu_custom_call.1} parent=1 // pred_fallthru
      _
    // Predicated region
    $region18: #{tpu_custom_call.1} parent=1 // pred_check
      _
    $region19: #{tpu_custom_call.1} parent=1 // pred_check_branch
      %45 = sbr.rel (0) target = $region21
    $region20: #{tpu_custom_call.1} parent=1 // pred_region
      _
    $region21: #{tpu_custom_call.1} parent=1 // pred_fallthru
      _
    // Predicated region
    $region22: #{tpu_custom_call.1} parent=1 // pred_check
      _
    $region23: #{tpu_custom_call.1} parent=1 // pred_check_branch
      %47 = sbr.rel (0) target = $region25
    $region24: #{tpu_custom_call.1} parent=1 // pred_region
      %s49 = ssub.s32 1024, 1024
      %50 = vsyncadd [#allocation7], %s49
      %s51 = sshll.u32 [#allocation8], 4
      %s52 = int_to_ptr.vmem [resolvable:$true] %s51
      %57 = dma.hbm_to_vmem [thread:$0]  %s5, 1024, %s52, [#allocation7], 64, 64, 4
    $region25: #{tpu_custom_call.1} parent=1 // pred_fallthru
      _
    // Predicated region
    $region26: #{tpu_custom_call.1} parent=1 // pred_check
      _
    $region27: #{tpu_custom_call.1} parent=1 // pred_check_branch
      %59 = sbr.rel (0) target = $region29
    $region28: #{tpu_custom_call.1} parent=1 // pred_region
      _
    $region29: #{tpu_custom_call.1} parent=1 // pred_fallthru
      _
    // Predicated region
    $region30: #{tpu_custom_call.1} parent=1 // pred_check
      _
    $region31: #{tpu_custom_call.1} parent=1 // pred_check_branch
      %61 = sbr.rel (0) target = $region33
    $region32: #{tpu_custom_call.1} parent=1 // pred_region
      %62 = dma.done [#allocation4], 3200
    $region33: #{tpu_custom_call.1} parent=1 // pred_fallthru
      _
    // Predicated region
    $region34: #{tpu_custom_call.1} parent=1 // pred_check
      _
    $region35: #{tpu_custom_call.1} parent=1 // pred_check_branch
      %64 = sbr.rel (0) target = $region37
    $region36: #{tpu_custom_call.1} parent=1 // pred_region
      %65 = dma.done [#allocation7], 1024
    $region37: #{tpu_custom_call.1} parent=1 // pred_fallthru
      _
    // Predicated region
    $region38: #{tpu_custom_call.1} parent=1 // pred_check
      _
    $region39: #{tpu_custom_call.1} parent=1 // pred_check_branch
      %67 = sbr.rel (0) target = $region41
    $region40: #{tpu_custom_call.1} parent=1 // pred_region
      %68 = dma.done [#allocation7], 1024
    $region41: #{tpu_custom_call.1} parent=1 // pred_fallthru
      _
    %s70 = sld [smem:[#allocation2]]
    %v71 = vld [vmem:[#allocation3] sm:$0xff]
    %v72 = vld [vmem:[#allocation3 + $0x8] sm:$0xff]
    %v73 = vld [vmem:[#allocation3 + $0x10] sm:$0xff]
    %v74 = vld [vmem:[#allocation3 + $0x18] sm:$0xff]
    %v75 = vld [vmem:[#allocation3 + $0x20] sm:$0xff]
    %v76 = vld [vmem:[#allocation3 + $0x28] sm:$0xff]
    %v77 = vld [vmem:[#allocation3 + $0x30] sm:$0xff]
    %v78 = vld [vmem:[#allocation3 + $0x38] sm:$0xff]
    %v79 = vld [vmem:[#allocation3 + $0x40] sm:$0xff]
    %v80 = vld [vmem:[#allocation3 + $0x48] sm:$0xff]
    %v81 = vld [vmem:[#allocation3 + $0x50] sm:$0xff]
    %v82 = vld [vmem:[#allocation3 + $0x58] sm:$0xff]
    %v83 = vld [vmem:[#allocation3 + $0x60] sm:$0xff]
    %v84 = vld [vmem:[#allocation3 + $0x68] sm:$0xff]
    %v85 = vld [vmem:[#allocation3 + $0x70] sm:$0xff]
    %v86 = vld [vmem:[#allocation3 + $0x78] sm:$0xff]
    %v87 = vld [vmem:[#allocation3 + $0x80] sm:$0xff]
    %v88 = vld [vmem:[#allocation3 + $0x88] sm:$0xff]
    %v89 = vld [vmem:[#allocation3 + $0x90] sm:$0xff]
    %v90 = vld [vmem:[#allocation3 + $0x98] sm:$0xff]
    %v91 = vld [vmem:[#allocation3 + $0xa0] sm:$0xff]
    %v92 = vld [vmem:[#allocation3 + $0xa8] sm:$0xff]
    %v93 = vld [vmem:[#allocation3 + $0xb0] sm:$0xff]
    %v94 = vld [vmem:[#allocation3 + $0xb8] sm:$0xff]
    %v95 = vld [vmem:[#allocation3 + $0xc0] sm:$0xff]
    %v96 = vld [vmem:[%s3] sm:$0x1]
    %v97 = vstv %s70
    %v98 = vmul.f32 %v97, %v96
    %v99 = vld [vmem:[%s4] sm:$0x1]
    %v100 = vadd.f32 %v98, %v99
    %v101 = vpack.c.bf16 %v72, %v71
    %v102 = vpack.c.bf16 %v74, %v73
    %v103 = vpack.c.bf16 %v76, %v75
    %v104 = vpack.c.bf16 %v78, %v77
    %v105 = vpack.c.bf16 %v80, %v79
    %v106 = vpack.c.bf16 %v82, %v81
    %v107 = vpack.c.bf16 %v84, %v83
    %v108 = vpack.c.bf16 %v86, %v85
    %v109 = vpack.c.bf16 %v88, %v87
    %v110 = vpack.c.bf16 %v90, %v89
    %v111 = vpack.c.bf16 %v92, %v91
    %v112 = vpack.c.bf16 %v94, %v93
    %v113 = vpack.c.bf16 %v95, %v95
    %v114 = vld [vmem:[#allocation6] sm:$0xf]
    %v115 = vld [vmem:[#allocation6 + $0x4] sm:$0xf]
    %v116 = vld [vmem:[#allocation6 + $0x8] sm:$0xf]
    %v117 = vld [vmem:[#allocation6 + $0xc] sm:$0xf]
    %v118 = vld [vmem:[#allocation6 + $0x10] sm:$0xf]
    %v119 = vld [vmem:[#allocation6 + $0x14] sm:$0xf]
    %v120 = vld [vmem:[#allocation6 + $0x18] sm:$0xf]
    %v121 = vld [vmem:[#allocation6 + $0x1c] sm:$0xf]
    %v122 = vld [vmem:[#allocation6 + $0x20] sm:$0xf]
    %v123 = vld [vmem:[#allocation6 + $0x24] sm:$0xf]
    %v124 = vld [vmem:[#allocation6 + $0x28] sm:$0xf]
    %v125 = vld [vmem:[#allocation6 + $0x2c] sm:$0xf]
    %v126 = vld [vmem:[#allocation6 + $0x30] sm:$0xf]
    %v127 = vld [vmem:[#allocation6 + $0x34] sm:$0xf]
    %v128 = vld [vmem:[#allocation6 + $0x38] sm:$0xf]
    %v129 = vld [vmem:[#allocation6 + $0x3c] sm:$0xf]
    %v131 = vlaneseq
    %v132 = vshrl.u32 %v131, 7
    %v133 = vsub.s32 0, %v132
    %v134 = vrot.slane %v100, %v133
    %v152 = vunpack.c.l.b16 %v114
    %v153 = vunpack.c.l.b16 %v115
    %v154 = vunpack.c.l.b16 %v116
    %v155 = vunpack.c.l.b16 %v117
    %v156 = vunpack.c.l.b16 %v118
    %v157 = vunpack.c.l.b16 %v119
    %v158 = vunpack.c.l.b16 %v120
    %v159 = vunpack.c.l.b16 %v121
    %v160 = vunpack.c.l.b16 %v122
    %v161 = vunpack.c.l.b16 %v123
    %v162 = vunpack.c.l.b16 %v124
    %v163 = vunpack.c.l.b16 %v125
    %v164 = vunpack.c.l.b16 %v126
    %v165 = vunpack.c.l.b16 %v127
    %v166 = vunpack.c.l.b16 %v128
    %v167 = vunpack.c.l.b16 %v129
    %v168 = vpack.c.b16 %v153, %v152
    %v169 = vpack.c.b16 %v155, %v154
    %v170 = vpack.c.b16 %v157, %v156
    %v171 = vpack.c.b16 %v159, %v158
    %v172 = vpack.c.b16 %v161, %v160
    %v173 = vpack.c.b16 %v163, %v162
    %v174 = vpack.c.b16 %v165, %v164
    %v175 = vpack.c.b16 %v167, %v166
    %184 = vmatprep.subr.bf16.mxu0 0
    %185 = vmatpush1.bf16.msra.mxu0 %v168
    %186 = vmatprep.subr.bf16.mxu0 0
    %187 = vmatpush1.bf16.msra.mxu0 %v169
    %188 = vmatprep.subr.bf16.mxu0 0
    %189 = vmatpush1.bf16.msra.mxu0 %v170
    %190 = vmatprep.subr.bf16.mxu0 0
    %191 = vmatpush1.bf16.msra.mxu0 %v171
    %192 = vmatprep.subr.bf16.mxu0 0
    %193 = vmatpush1.bf16.msra.mxu0 %v172
    %194 = vmatprep.subr.bf16.mxu0 0
    %195 = vmatpush1.bf16.msra.mxu0 %v173
    %196 = vmatprep.subr.bf16.mxu0 0
    %197 = vmatpush1.bf16.msra.mxu0 %v174
    %198 = vmatprep.subr.bf16.mxu0 0
    %199 = vmatpush1.bf16.msra.mxu0 %v175
    %200 = vmatprep.subr.bf16.mxu0 0
    %201 = vmatpush1.bf16.msra.mxu0 0
    %202 = vmatprep.subr.bf16.mxu0 0
    %203 = vmatpush1.bf16.msra.mxu0 0
    %204 = vmatprep.subr.bf16.mxu0 0
    %205 = vmatpush1.bf16.msra.mxu0 0
    %206 = vmatprep.subr.bf16.mxu0 0
    %207 = vmatpush1.bf16.msra.mxu0 0
    %208 = vmatprep.subr.bf16.mxu0 0
    %209 = vmatpush1.bf16.msra.mxu0 0
    %210 = vmatprep.subr.bf16.mxu0 0
    %211 = vmatpush1.bf16.msra.mxu0 0
    %212 = vmatprep.subr.bf16.mxu0 0
    %213 = vmatpush1.bf16.msra.mxu0 0
    %214 = vmatprep.subr.bf16.mxu0 0
    %215 = vmatpush1.bf16.msra.mxu0 0
    %216 = vmatprep.mubr.bf16.mxu0 0
    %217 = vmatmul.mubr.bf16.gmra.mrb[0].mxu0 %v101
    %v218 = vpop.f32.mrb[0].mxu0
    %v219 = vadd.f32 %v134, %v218
    %v220 = vpop.f32.mrb[0].mxu0
    %v221 = vpop.f32.mrb[0].mxu0
    %v222 = vadd.f32 %v134, %v221
    %v223 = vpop.f32.mrb[0].mxu0
    %224 = vmatprep.mubr.bf16.mxu0 0
    %225 = vmatmul.mubr.bf16.gmra.mrb[0].mxu0 %v102
    %v226 = vpop.f32.mrb[0].mxu0
    %v227 = vadd.f32 %v134, %v226
    %v228 = vpop.f32.mrb[0].mxu0
    %v229 = vpop.f32.mrb[0].mxu0
    %v230 = vadd.f32 %v134, %v229
    %v231 = vpop.f32.mrb[0].mxu0
    %232 = vmatprep.mubr.bf16.mxu0 0
    %233 = vmatmul.mubr.bf16.gmra.mrb[0].mxu0 %v103
    %v234 = vpop.f32.mrb[0].mxu0
    %v235 = vadd.f32 %v134, %v234
    %v236 = vpop.f32.mrb[0].mxu0
    %v237 = vpop.f32.mrb[0].mxu0
    %v238 = vadd.f32 %v134, %v237
    %v239 = vpop.f32.mrb[0].mxu0
    %240 = vmatprep.mubr.bf16.mxu0 0
    %241 = vmatmul.mubr.bf16.gmra.mrb[0].mxu0 %v104
    %v242 = vpop.f32.mrb[0].mxu0
    %v243 = vadd.f32 %v134, %v242
    %v244 = vpop.f32.mrb[0].mxu0
    %v245 = vpop.f32.mrb[0].mxu0
    %v246 = vadd.f32 %v134, %v245
    %v247 = vpop.f32.mrb[0].mxu0
    %248 = vmatprep.mubr.bf16.mxu0 0
    %249 = vmatmul.mubr.bf16.gmra.mrb[0].mxu0 %v105
    %v250 = vpop.f32.mrb[0].mxu0
    %v251 = vadd.f32 %v134, %v250
    %v252 = vpop.f32.mrb[0].mxu0
    %v253 = vpop.f32.mrb[0].mxu0
    %v254 = vadd.f32 %v134, %v253
    %v255 = vpop.f32.mrb[0].mxu0
    %256 = vmatprep.mubr.bf16.mxu0 0
    %257 = vmatmul.mubr.bf16.gmra.mrb[0].mxu0 %v106
    %v258 = vpop.f32.mrb[0].mxu0
    %v259 = vadd.f32 %v134, %v258
    %v260 = vpop.f32.mrb[0].mxu0
    %v261 = vpop.f32.mrb[0].mxu0
    %v262 = vadd.f32 %v134, %v261
    %v263 = vpop.f32.mrb[0].mxu0
    %264 = vmatprep.mubr.bf16.mxu0 0
    %265 = vmatmul.mubr.bf16.gmra.mrb[0].mxu0 %v107
    %v266 = vpop.f32.mrb[0].mxu0
    %v267 = vadd.f32 %v134, %v266
    %v268 = vpop.f32.mrb[0].mxu0
    %v269 = vpop.f32.mrb[0].mxu0
    %v270 = vadd.f32 %v134, %v269
    %v271 = vpop.f32.mrb[0].mxu0
    %272 = vmatprep.mubr.bf16.mxu0 0
    %273 = vmatmul.mubr.bf16.gmra.mrb[0].mxu0 %v108
    %v274 = vpop.f32.mrb[0].mxu0
    %v275 = vadd.f32 %v134, %v274
    %v276 = vpop.f32.mrb[0].mxu0
    %v277 = vpop.f32.mrb[0].mxu0
    %v278 = vadd.f32 %v134, %v277
    %v279 = vpop.f32.mrb[0].mxu0
    %280 = vmatprep.mubr.bf16.mxu0 0
    %281 = vmatmul.mubr.bf16.gmra.mrb[0].mxu0 %v109
    %v282 = vpop.f32.mrb[0].mxu0
    %v283 = vadd.f32 %v134, %v282
    %v284 = vpop.f32.mrb[0].mxu0
    %v285 = vpop.f32.mrb[0].mxu0
    %v286 = vadd.f32 %v134, %v285
    %v287 = vpop.f32.mrb[0].mxu0
    %288 = vmatprep.mubr.bf16.mxu0 0
    %289 = vmatmul.mubr.bf16.gmra.mrb[0].mxu0 %v110
    %v290 = vpop.f32.mrb[0].mxu0
    %v291 = vadd.f32 %v134, %v290
    %v292 = vpop.f32.mrb[0].mxu0
    %v293 = vpop.f32.mrb[0].mxu0
    %v294 = vadd.f32 %v134, %v293
    %v295 = vpop.f32.mrb[0].mxu0
    %296 = vmatprep.mubr.bf16.mxu0 0
    %297 = vmatmul.mubr.bf16.gmra.mrb[0].mxu0 %v111
    %v298 = vpop.f32.mrb[0].mxu0
    %v299 = vadd.f32 %v134, %v298
    %v300 = vpop.f32.mrb[0].mxu0
    %v301 = vpop.f32.mrb[0].mxu0
    %v302 = vadd.f32 %v134, %v301
    %v303 = vpop.f32.mrb[0].mxu0
    %304 = vmatprep.mubr.bf16.mxu0 0
    %305 = vmatmul.mubr.bf16.gmra.mrb[0].mxu0 %v112
    %v306 = vpop.f32.mrb[0].mxu0
    %v307 = vadd.f32 %v134, %v306
    %v308 = vpop.f32.mrb[0].mxu0
    %v309 = vpop.f32.mrb[0].mxu0
    %v310 = vadd.f32 %v134, %v309
    %v311 = vpop.f32.mrb[0].mxu0
    %312 = vmatprep.mubr.bf16.mxu0 0
    %313 = vmatmul.mubr.bf16.gmra.mrb[0].mxu0 %v113
    %v314 = vpop.f32.mrb[0].mxu0
    %v315 = vadd.f32 %v134, %v314
    %v316 = vpop.f32.mrb[0].mxu0
    %v317 = vpop.f32.mrb[0].mxu0
    %v318 = vpop.f32.mrb[0].mxu0
    %319 = vdwg.mxu0
    %v320 = vtanh.pop %v219
    %v321 = vtanh.pop %v222
    %v322 = vtanh.pop %v227
    %v323 = vtanh.pop %v230
    %v324 = vtanh.pop %v235
    %v325 = vtanh.pop %v238
    %v326 = vtanh.pop %v243
    %v327 = vtanh.pop %v246
    %v328 = vtanh.pop %v251
    %v329 = vtanh.pop %v254
    %v330 = vtanh.pop %v259
    %v331 = vtanh.pop %v262
    %v332 = vtanh.pop %v267
    %v333 = vtanh.pop %v270
    %v334 = vtanh.pop %v275
    %v335 = vtanh.pop %v278
    %v336 = vtanh.pop %v283
    %v337 = vtanh.pop %v286
    %v338 = vtanh.pop %v291
    %v339 = vtanh.pop %v294
    %v340 = vtanh.pop %v299
    %v341 = vtanh.pop %v302
    %v342 = vtanh.pop %v307
    %v343 = vtanh.pop %v310
    %v344 = vtanh.pop %v315
    %v345 = vpack.c.bf16 %v321, %v320
    %v346 = vpack.c.bf16 %v323, %v322
    %v347 = vpack.c.bf16 %v325, %v324
    %v348 = vpack.c.bf16 %v327, %v326
    %v349 = vpack.c.bf16 %v329, %v328
    %v350 = vpack.c.bf16 %v331, %v330
    %v351 = vpack.c.bf16 %v333, %v332
    %v352 = vpack.c.bf16 %v335, %v334
    %v353 = vpack.c.bf16 %v337, %v336
    %v354 = vpack.c.bf16 %v339, %v338
    %v355 = vpack.c.bf16 %v341, %v340
    %v356 = vpack.c.bf16 %v343, %v342
    %v357 = vpack.c.bf16 %v344, %v344
    %v358 = vld [vmem:[#allocation8] sm:$0xf]
    %v359 = vld [vmem:[#allocation8 + $0x4] sm:$0xf]
    %v360 = vld [vmem:[#allocation8 + $0x8] sm:$0xf]
    %v361 = vld [vmem:[#allocation8 + $0xc] sm:$0xf]
    %v362 = vld [vmem:[#allocation8 + $0x10] sm:$0xf]
    %v363 = vld [vmem:[#allocation8 + $0x14] sm:$0xf]
    %v364 = vld [vmem:[#allocation8 + $0x18] sm:$0xf]
    %v365 = vld [vmem:[#allocation8 + $0x1c] sm:$0xf]
    %v366 = vld [vmem:[#allocation8 + $0x20] sm:$0xf]
    %v367 = vld [vmem:[#allocation8 + $0x24] sm:$0xf]
    %v368 = vld [vmem:[#allocation8 + $0x28] sm:$0xf]
    %v369 = vld [vmem:[#allocation8 + $0x2c] sm:$0xf]
    %v370 = vld [vmem:[#allocation8 + $0x30] sm:$0xf]
    %v371 = vld [vmem:[#allocation8 + $0x34] sm:$0xf]
    %v372 = vld [vmem:[#allocation8 + $0x38] sm:$0xf]
    %v373 = vld [vmem:[#allocation8 + $0x3c] sm:$0xf]
    %v374 = vld [vmem:[%s6] sm:$0x1]
    %v376 = vlaneseq
    %v377 = vshrl.u32 %v376, 7
    %v378 = vsub.s32 0, %v377
    %v379 = vrot.slane %v374, %v378
    %v397 = vunpack.c.l.b16 %v358
    %v398 = vunpack.c.l.b16 %v359
    %v399 = vunpack.c.l.b16 %v360
    %v400 = vunpack.c.l.b16 %v361
    %v401 = vunpack.c.l.b16 %v362
    %v402 = vunpack.c.l.b16 %v363
    %v403 = vunpack.c.l.b16 %v364
    %v404 = vunpack.c.l.b16 %v365
    %v405 = vunpack.c.l.b16 %v366
    %v406 = vunpack.c.l.b16 %v367
    %v407 = vunpack.c.l.b16 %v368
    %v408 = vunpack.c.l.b16 %v369
    %v409 = vunpack.c.l.b16 %v370
    %v410 = vunpack.c.l.b16 %v371
    %v411 = vunpack.c.l.b16 %v372
    %v412 = vunpack.c.l.b16 %v373
    %v413 = vpack.c.b16 %v398, %v397
    %v414 = vpack.c.b16 %v400, %v399
    %v415 = vpack.c.b16 %v402, %v401
    %v416 = vpack.c.b16 %v404, %v403
    %v417 = vpack.c.b16 %v406, %v405
    %v418 = vpack.c.b16 %v408, %v407
    %v419 = vpack.c.b16 %v410, %v409
    %v420 = vpack.c.b16 %v412, %v411
    %429 = vmatprep.subr.bf16.mxu0 0
    %430 = vmatpush1.bf16.msra.mxu0 %v413
    %431 = vmatprep.subr.bf16.mxu0 0
    %432 = vmatpush1.bf16.msra.mxu0 %v414
    %433 = vmatprep.subr.bf16.mxu0 0
    %434 = vmatpush1.bf16.msra.mxu0 %v415
    %435 = vmatprep.subr.bf16.mxu0 0
    %436 = vmatpush1.bf16.msra.mxu0 %v416
    %437 = vmatprep.subr.bf16.mxu0 0
    %438 = vmatpush1.bf16.msra.mxu0 %v417
    %439 = vmatprep.subr.bf16.mxu0 0
    %440 = vmatpush1.bf16.msra.mxu0 %v418
    %441 = vmatprep.subr.bf16.mxu0 0
    %442 = vmatpush1.bf16.msra.mxu0 %v419
    %443 = vmatprep.subr.bf16.mxu0 0
    %444 = vmatpush1.bf16.msra.mxu0 %v420
    %445 = vmatprep.subr.bf16.mxu0 0
    %446 = vmatpush1.bf16.msra.mxu0 0
    %447 = vmatprep.subr.bf16.mxu0 0
    %448 = vmatpush1.bf16.msra.mxu0 0
    %449 = vmatprep.subr.bf16.mxu0 0
    %450 = vmatpush1.bf16.msra.mxu0 0
    %451 = vmatprep.subr.bf16.mxu0 0
    %452 = vmatpush1.bf16.msra.mxu0 0
    %453 = vmatprep.subr.bf16.mxu0 0
    %454 = vmatpush1.bf16.msra.mxu0 0
    %455 = vmatprep.subr.bf16.mxu0 0
    %456 = vmatpush1.bf16.msra.mxu0 0
    %457 = vmatprep.subr.bf16.mxu0 0
    %458 = vmatpush1.bf16.msra.mxu0 0
    %459 = vmatprep.subr.bf16.mxu0 0
    %460 = vmatpush1.bf16.msra.mxu0 0
    %461 = vmatprep.mubr.bf16.mxu0 0
    %462 = vmatmul.mubr.bf16.gmra.mrb[0].mxu0 %v345
    %v463 = vpop.f32.mrb[0].mxu0
    %v464 = vadd.f32 %v379, %v463
    %v465 = vpop.f32.mrb[0].mxu0
    %v466 = vpop.f32.mrb[0].mxu0
    %v467 = vadd.f32 %v379, %v466
    %v468 = vpop.f32.mrb[0].mxu0
    %469 = vmatprep.mubr.bf16.mxu0 0
    %470 = vmatmul.mubr.bf16.gmra.mrb[0].mxu0 %v346
    %v471 = vpop.f32.mrb[0].mxu0
    %v472 = vadd.f32 %v379, %v471
    %v473 = vpop.f32.mrb[0].mxu0
    %v474 = vpop.f32.mrb[0].mxu0
    %v475 = vadd.f32 %v379, %v474
    %v476 = vpop.f32.mrb[0].mxu0
    %477 = vmatprep.mubr.bf16.mxu0 0
    %478 = vmatmul.mubr.bf16.gmra.mrb[0].mxu0 %v347
    %v479 = vpop.f32.mrb[0].mxu0
    %v480 = vadd.f32 %v379, %v479
    %v481 = vpop.f32.mrb[0].mxu0
    %v482 = vpop.f32.mrb[0].mxu0
    %v483 = vadd.f32 %v379, %v482
    %v484 = vpop.f32.mrb[0].mxu0
    %485 = vmatprep.mubr.bf16.mxu0 0
    %486 = vmatmul.mubr.bf16.gmra.mrb[0].mxu0 %v348
    %v487 = vpop.f32.mrb[0].mxu0
    %v488 = vadd.f32 %v379, %v487
    %v489 = vpop.f32.mrb[0].mxu0
    %v490 = vpop.f32.mrb[0].mxu0
    %v491 = vadd.f32 %v379, %v490
    %v492 = vpop.f32.mrb[0].mxu0
    %493 = vmatprep.mubr.bf16.mxu0 0
    %494 = vmatmul.mubr.bf16.gmra.mrb[0].mxu0 %v349
    %v495 = vpop.f32.mrb[0].mxu0
    %v496 = vadd.f32 %v379, %v495
    %v497 = vpop.f32.mrb[0].mxu0
    %v498 = vpop.f32.mrb[0].mxu0
    %v499 = vadd.f32 %v379, %v498
    %v500 = vpop.f32.mrb[0].mxu0
    %501 = vmatprep.mubr.bf16.mxu0 0
    %502 = vmatmul.mubr.bf16.gmra.mrb[0].mxu0 %v350
    %v503 = vpop.f32.mrb[0].mxu0
    %v504 = vadd.f32 %v379, %v503
    %v505 = vpop.f32.mrb[0].mxu0
    %v506 = vpop.f32.mrb[0].mxu0
    %v507 = vadd.f32 %v379, %v506
    %v508 = vpop.f32.mrb[0].mxu0
    %509 = vmatprep.mubr.bf16.mxu0 0
    %510 = vmatmul.mubr.bf16.gmra.mrb[0].mxu0 %v351
    %v511 = vpop.f32.mrb[0].mxu0
    %v512 = vadd.f32 %v379, %v511
    %v513 = vpop.f32.mrb[0].mxu0
    %v514 = vpop.f32.mrb[0].mxu0
    %v515 = vadd.f32 %v379, %v514
    %v516 = vpop.f32.mrb[0].mxu0
    %517 = vmatprep.mubr.bf16.mxu0 0
    %518 = vmatmul.mubr.bf16.gmra.mrb[0].mxu0 %v352
    %v519 = vpop.f32.mrb[0].mxu0
    %v520 = vadd.f32 %v379, %v519
    %v521 = vpop.f32.mrb[0].mxu0
    %v522 = vpop.f32.mrb[0].mxu0
    %v523 = vadd.f32 %v379, %v522
    %v524 = vpop.f32.mrb[0].mxu0
    %525 = vmatprep.mubr.bf16.mxu0 0
    %526 = vmatmul.mubr.bf16.gmra.mrb[0].mxu0 %v353
    %v527 = vpop.f32.mrb[0].mxu0
    %v528 = vadd.f32 %v379, %v527
    %v529 = vpop.f32.mrb[0].mxu0
    %v530 = vpop.f32.mrb[0].mxu0
    %v531 = vadd.f32 %v379, %v530
    %v532 = vpop.f32.mrb[0].mxu0
    %533 = vmatprep.mubr.bf16.mxu0 0
    %534 = vmatmul.mubr.bf16.gmra.mrb[0].mxu0 %v354
    %v535 = vpop.f32.mrb[0].mxu0
    %v536 = vadd.f32 %v379, %v535
    %v537 = vpop.f32.mrb[0].mxu0
    %v538 = vpop.f32.mrb[0].mxu0
    %v539 = vadd.f32 %v379, %v538
    %v540 = vpop.f32.mrb[0].mxu0
    %541 = vmatprep.mubr.bf16.mxu0 0
    %542 = vmatmul.mubr.bf16.gmra.mrb[0].mxu0 %v355
    %v543 = vpop.f32.mrb[0].mxu0
    %v544 = vadd.f32 %v379, %v543
    %v545 = vpop.f32.mrb[0].mxu0
    %v546 = vpop.f32.mrb[0].mxu0
    %v547 = vadd.f32 %v379, %v546
    %v548 = vpop.f32.mrb[0].mxu0
    %549 = vmatprep.mubr.bf16.mxu0 0
    %550 = vmatmul.mubr.bf16.gmra.mrb[0].mxu0 %v356
    %v551 = vpop.f32.mrb[0].mxu0
    %v552 = vadd.f32 %v379, %v551
    %v553 = vpop.f32.mrb[0].mxu0
    %v554 = vpop.f32.mrb[0].mxu0
    %v555 = vadd.f32 %v379, %v554
    %v556 = vpop.f32.mrb[0].mxu0
    %557 = vmatprep.mubr.bf16.mxu0 0
    %558 = vmatmul.mubr.bf16.gmra.mrb[0].mxu0 %v357
    %v559 = vpop.f32.mrb[0].mxu0
    %v560 = vadd.f32 %v379, %v559
    %v561 = vpop.f32.mrb[0].mxu0
    %v562 = vpop.f32.mrb[0].mxu0
    %v563 = vpop.f32.mrb[0].mxu0
    %564 = vdwg.mxu0
    %v565 = vlaneseq
    %v566 = vand.u32 %v565, 127
    %vm567 = vcmp.lt.s32.totalorder %v566, 64
    %v568 = vsel %vm567, 1, 0
    %vm569 = vcmp.eq.s32.totalorder %v568, 1
    %v570 = vsel %vm569, %v71, 0.0
    %v571 = vsel %vm569, %v72, 0.0
    %v572 = vsel %vm569, %v73, 0.0
    %v573 = vsel %vm569, %v74, 0.0
    %v574 = vsel %vm569, %v75, 0.0
    %v575 = vsel %vm569, %v76, 0.0
    %v576 = vsel %vm569, %v77, 0.0
    %v577 = vsel %vm569, %v78, 0.0
    %v578 = vsel %vm569, %v79, 0.0
    %v579 = vsel %vm569, %v80, 0.0
    %v580 = vsel %vm569, %v81, 0.0
    %v581 = vsel %vm569, %v82, 0.0
    %v582 = vsel %vm569, %v83, 0.0
    %v583 = vsel %vm569, %v84, 0.0
    %v584 = vsel %vm569, %v85, 0.0
    %v585 = vsel %vm569, %v86, 0.0
    %v586 = vsel %vm569, %v87, 0.0
    %v587 = vsel %vm569, %v88, 0.0
    %v588 = vsel %vm569, %v89, 0.0
    %v589 = vsel %vm569, %v90, 0.0
    %v590 = vsel %vm569, %v91, 0.0
    %v591 = vsel %vm569, %v92, 0.0
    %v592 = vsel %vm569, %v93, 0.0
    %v593 = vsel %vm569, %v94, 0.0
    %v594 = vsel %vm569, %v95, 0.0
    %v595 = vmul.f32 %v464, %v570
    %v596 = vmul.f32 %v467, %v571
    %v597 = vmul.f32 %v472, %v572
    %v598 = vmul.f32 %v475, %v573
    %v599 = vmul.f32 %v480, %v574
    %v600 = vmul.f32 %v483, %v575
    %v601 = vmul.f32 %v488, %v576
    %v602 = vmul.f32 %v491, %v577
    %v603 = vmul.f32 %v496, %v578
    %v604 = vmul.f32 %v499, %v579
    %v605 = vmul.f32 %v504, %v580
    %v606 = vmul.f32 %v507, %v581
    %v607 = vmul.f32 %v512, %v582
    %v608 = vmul.f32 %v515, %v583
    %v609 = vmul.f32 %v520, %v584
    %v610 = vmul.f32 %v523, %v585
    %v611 = vmul.f32 %v528, %v586
    %v612 = vmul.f32 %v531, %v587
    %v613 = vmul.f32 %v536, %v588
    %v614 = vmul.f32 %v539, %v589
    %v615 = vmul.f32 %v544, %v590
    %v616 = vmul.f32 %v547, %v591
    %v617 = vmul.f32 %v552, %v592
    %v618 = vmul.f32 %v555, %v593
    %v619 = vmul.f32 %v560, %v594
    %620 = vadd.xlane.f32.xlu0 %v595
    %v621 = vpop.xlane.xlu0 %620
    %622 = vadd.xlane.f32.xlu0 %v596
    %v623 = vpop.xlane.xlu0 %622
    %624 = vadd.xlane.f32.xlu0 %v597
    %v625 = vpop.xlane.xlu0 %624
    %626 = vadd.xlane.f32.xlu0 %v598
    %v627 = vpop.xlane.xlu0 %626
    %628 = vadd.xlane.f32.xlu0 %v599
    %v629 = vpop.xlane.xlu0 %628
    %630 = vadd.xlane.f32.xlu0 %v600
    %v631 = vpop.xlane.xlu0 %630
    %632 = vadd.xlane.f32.xlu0 %v601
    %v633 = vpop.xlane.xlu0 %632
    %634 = vadd.xlane.f32.xlu0 %v602
    %v635 = vpop.xlane.xlu0 %634
    %636 = vadd.xlane.f32.xlu0 %v603
    %v637 = vpop.xlane.xlu0 %636
    %638 = vadd.xlane.f32.xlu0 %v604
    %v639 = vpop.xlane.xlu0 %638
    %640 = vadd.xlane.f32.xlu0 %v605
    %v641 = vpop.xlane.xlu0 %640
    %642 = vadd.xlane.f32.xlu0 %v606
    %v643 = vpop.xlane.xlu0 %642
    %644 = vadd.xlane.f32.xlu0 %v607
    %v645 = vpop.xlane.xlu0 %644
    %646 = vadd.xlane.f32.xlu0 %v608
    %v647 = vpop.xlane.xlu0 %646
    %648 = vadd.xlane.f32.xlu0 %v609
    %v649 = vpop.xlane.xlu0 %648
    %650 = vadd.xlane.f32.xlu0 %v610
    %v651 = vpop.xlane.xlu0 %650
    %652 = vadd.xlane.f32.xlu0 %v611
    %v653 = vpop.xlane.xlu0 %652
    %654 = vadd.xlane.f32.xlu0 %v612
    %v655 = vpop.xlane.xlu0 %654
    %656 = vadd.xlane.f32.xlu0 %v613
    %v657 = vpop.xlane.xlu0 %656
    %658 = vadd.xlane.f32.xlu0 %v614
    %v659 = vpop.xlane.xlu0 %658
    %660 = vadd.xlane.f32.xlu0 %v615
    %v661 = vpop.xlane.xlu0 %660
    %662 = vadd.xlane.f32.xlu0 %v616
    %v663 = vpop.xlane.xlu0 %662
    %664 = vadd.xlane.f32.xlu0 %v617
    %v665 = vpop.xlane.xlu0 %664
    %666 = vadd.xlane.f32.xlu0 %v618
    %v667 = vpop.xlane.xlu0 %666
    %668 = vadd.xlane.f32.xlu0 %v619
    %v669 = vpop.xlane.xlu0 %668
    %v670 = vmul.f32 %v570, %v570
    %v671 = vmul.f32 %v571, %v571
    %v672 = vmul.f32 %v572, %v572
    %v673 = vmul.f32 %v573, %v573
    %v674 = vmul.f32 %v574, %v574
    %v675 = vmul.f32 %v575, %v575
    %v676 = vmul.f32 %v576, %v576
    %v677 = vmul.f32 %v577, %v577
    %v678 = vmul.f32 %v578, %v578
    %v679 = vmul.f32 %v579, %v579
    %v680 = vmul.f32 %v580, %v580
    %v681 = vmul.f32 %v581, %v581
    %v682 = vmul.f32 %v582, %v582
    %v683 = vmul.f32 %v583, %v583
    %v684 = vmul.f32 %v584, %v584
    %v685 = vmul.f32 %v585, %v585
    %v686 = vmul.f32 %v586, %v586
    %v687 = vmul.f32 %v587, %v587
    %v688 = vmul.f32 %v588, %v588
    %v689 = vmul.f32 %v589, %v589
    %v690 = vmul.f32 %v590, %v590
    %v691 = vmul.f32 %v591, %v591
    %v692 = vmul.f32 %v592, %v592
    %v693 = vmul.f32 %v593, %v593
    %v694 = vmul.f32 %v594, %v594
    %695 = vadd.xlane.f32.xlu0 %v670
    %v696 = vpop.xlane.xlu0 %695
    %697 = vadd.xlane.f32.xlu0 %v671
    %v698 = vpop.xlane.xlu0 %697
    %699 = vadd.xlane.f32.xlu0 %v672
    %v700 = vpop.xlane.xlu0 %699
    %701 = vadd.xlane.f32.xlu0 %v673
    %v702 = vpop.xlane.xlu0 %701
    %703 = vadd.xlane.f32.xlu0 %v674
    %v704 = vpop.xlane.xlu0 %703
    %705 = vadd.xlane.f32.xlu0 %v675
    %v706 = vpop.xlane.xlu0 %705
    %707 = vadd.xlane.f32.xlu0 %v676
    %v708 = vpop.xlane.xlu0 %707
    %709 = vadd.xlane.f32.xlu0 %v677
    %v710 = vpop.xlane.xlu0 %709
    %711 = vadd.xlane.f32.xlu0 %v678
    %v712 = vpop.xlane.xlu0 %711
    %713 = vadd.xlane.f32.xlu0 %v679
    %v714 = vpop.xlane.xlu0 %713
    %715 = vadd.xlane.f32.xlu0 %v680
    %v716 = vpop.xlane.xlu0 %715
    %717 = vadd.xlane.f32.xlu0 %v681
    %v718 = vpop.xlane.xlu0 %717
    %719 = vadd.xlane.f32.xlu0 %v682
    %v720 = vpop.xlane.xlu0 %719
    %721 = vadd.xlane.f32.xlu0 %v683
    %v722 = vpop.xlane.xlu0 %721
    %723 = vadd.xlane.f32.xlu0 %v684
    %v724 = vpop.xlane.xlu0 %723
    %725 = vadd.xlane.f32.xlu0 %v685
    %v726 = vpop.xlane.xlu0 %725
    %727 = vadd.xlane.f32.xlu0 %v686
    %v728 = vpop.xlane.xlu0 %727
    %729 = vadd.xlane.f32.xlu0 %v687
    %v730 = vpop.xlane.xlu0 %729
    %731 = vadd.xlane.f32.xlu0 %v688
    %v732 = vpop.xlane.xlu0 %731
    %733 = vadd.xlane.f32.xlu0 %v689
    %v734 = vpop.xlane.xlu0 %733
    %735 = vadd.xlane.f32.xlu0 %v690
    %v736 = vpop.xlane.xlu0 %735
    %737 = vadd.xlane.f32.xlu0 %v691
    %v738 = vpop.xlane.xlu0 %737
    %739 = vadd.xlane.f32.xlu0 %v692
    %v740 = vpop.xlane.xlu0 %739
    %741 = vadd.xlane.f32.xlu0 %v693
    %v742 = vpop.xlane.xlu0 %741
    %743 = vadd.xlane.f32.xlu0 %v694
    %v744 = vpop.xlane.xlu0 %743
    %v745 = vadd.f32 %v696, 1e-12
    %v746 = vadd.f32 %v698, 1e-12
    %v747 = vadd.f32 %v700, 1e-12
    %v748 = vadd.f32 %v702, 1e-12
    %v749 = vadd.f32 %v704, 1e-12
    %v750 = vadd.f32 %v706, 1e-12
    %v751 = vadd.f32 %v708, 1e-12
    %v752 = vadd.f32 %v710, 1e-12
    %v753 = vadd.f32 %v712, 1e-12
    %v754 = vadd.f32 %v714, 1e-12
    %v755 = vadd.f32 %v716, 1e-12
    %v756 = vadd.f32 %v718, 1e-12
    %v757 = vadd.f32 %v720, 1e-12
    %v758 = vadd.f32 %v722, 1e-12
    %v759 = vadd.f32 %v724, 1e-12
    %v760 = vadd.f32 %v726, 1e-12
    %v761 = vadd.f32 %v728, 1e-12
    %v762 = vadd.f32 %v730, 1e-12
    %v763 = vadd.f32 %v732, 1e-12
    %v764 = vadd.f32 %v734, 1e-12
    %v765 = vadd.f32 %v736, 1e-12
    %v766 = vadd.f32 %v738, 1e-12
    %v767 = vadd.f32 %v740, 1e-12
    %v768 = vadd.f32 %v742, 1e-12
    %v769 = vadd.f32 %v744, 1e-12
    %v770 = vrcp.pop %v745
    %v771 = vrcp.pop %v746
    %v772 = vrcp.pop %v747
    %v773 = vrcp.pop %v748
    %v774 = vrcp.pop %v749
    %v775 = vrcp.pop %v750
    %v776 = vrcp.pop %v751
    %v777 = vrcp.pop %v752
    %v778 = vrcp.pop %v753
    %v779 = vrcp.pop %v754
    %v780 = vrcp.pop %v755
    %v781 = vrcp.pop %v756
    %v782 = vrcp.pop %v757
    %v783 = vrcp.pop %v758
    %v784 = vrcp.pop %v759
    %v785 = vrcp.pop %v760
    %v786 = vrcp.pop %v761
    %v787 = vrcp.pop %v762
    %v788 = vrcp.pop %v763
    %v789 = vrcp.pop %v764
    %v790 = vrcp.pop %v765
    %v791 = vrcp.pop %v766
    %v792 = vrcp.pop %v767
    %v793 = vrcp.pop %v768
    %v794 = vrcp.pop %v769
    %v795 = vmul.f32 %v745, %v770
    %v796 = vmul.f32 %v746, %v771
    %v797 = vmul.f32 %v747, %v772
    %v798 = vmul.f32 %v748, %v773
    %v799 = vmul.f32 %v749, %v774
    %v800 = vmul.f32 %v750, %v775
    %v801 = vmul.f32 %v751, %v776
    %v802 = vmul.f32 %v752, %v777
    %v803 = vmul.f32 %v753, %v778
    %v804 = vmul.f32 %v754, %v779
    %v805 = vmul.f32 %v755, %v780
    %v806 = vmul.f32 %v756, %v781
    %v807 = vmul.f32 %v757, %v782
    %v808 = vmul.f32 %v758, %v783
    %v809 = vmul.f32 %v759, %v784
    %v810 = vmul.f32 %v760, %v785
    %v811 = vmul.f32 %v761, %v786
    %v812 = vmul.f32 %v762, %v787
    %v813 = vmul.f32 %v763, %v788
    %v814 = vmul.f32 %v764, %v789
    %v815 = vmul.f32 %v765, %v790
    %v816 = vmul.f32 %v766, %v791
    %v817 = vmul.f32 %v767, %v792
    %v818 = vmul.f32 %v768, %v793
    %v819 = vmul.f32 %v769, %v794
    %v820 = vsub.f32 2.0, %v795
    %v821 = vsub.f32 2.0, %v796
    %v822 = vsub.f32 2.0, %v797
    %v823 = vsub.f32 2.0, %v798
    %v824 = vsub.f32 2.0, %v799
    %v825 = vsub.f32 2.0, %v800
    %v826 = vsub.f32 2.0, %v801
    %v827 = vsub.f32 2.0, %v802
    %v828 = vsub.f32 2.0, %v803
    %v829 = vsub.f32 2.0, %v804
    %v830 = vsub.f32 2.0, %v805
    %v831 = vsub.f32 2.0, %v806
    %v832 = vsub.f32 2.0, %v807
    %v833 = vsub.f32 2.0, %v808
    %v834 = vsub.f32 2.0, %v809
    %v835 = vsub.f32 2.0, %v810
    %v836 = vsub.f32 2.0, %v811
    %v837 = vsub.f32 2.0, %v812
    %v838 = vsub.f32 2.0, %v813
    %v839 = vsub.f32 2.0, %v814
    %v840 = vsub.f32 2.0, %v815
    %v841 = vsub.f32 2.0, %v816
    %v842 = vsub.f32 2.0, %v817
    %v843 = vsub.f32 2.0, %v818
    %v844 = vsub.f32 2.0, %v819
    %v845 = vmul.f32 %v770, %v820
    %v846 = vmul.f32 %v771, %v821
    %v847 = vmul.f32 %v772, %v822
    %v848 = vmul.f32 %v773, %v823
    %v849 = vmul.f32 %v774, %v824
    %v850 = vmul.f32 %v775, %v825
    %v851 = vmul.f32 %v776, %v826
    %v852 = vmul.f32 %v777, %v827
    %v853 = vmul.f32 %v778, %v828
    %v854 = vmul.f32 %v779, %v829
    %v855 = vmul.f32 %v780, %v830
    %v856 = vmul.f32 %v781, %v831
    %v857 = vmul.f32 %v782, %v832
    %v858 = vmul.f32 %v783, %v833
    %v859 = vmul.f32 %v784, %v834
    %v860 = vmul.f32 %v785, %v835
    %v861 = vmul.f32 %v786, %v836
    %v862 = vmul.f32 %v787, %v837
    %v863 = vmul.f32 %v788, %v838
    %v864 = vmul.f32 %v789, %v839
    %v865 = vmul.f32 %v790, %v840
    %v866 = vmul.f32 %v791, %v841
    %v867 = vmul.f32 %v792, %v842
    %v868 = vmul.f32 %v793, %v843
    %v869 = vmul.f32 %v794, %v844
    %v870 = vmul.f32 %v621, %v845
    %v871 = vmul.f32 %v623, %v846
    %v872 = vmul.f32 %v625, %v847
    %v873 = vmul.f32 %v627, %v848
    %v874 = vmul.f32 %v629, %v849
    %v875 = vmul.f32 %v631, %v850
    %v876 = vmul.f32 %v633, %v851
    %v877 = vmul.f32 %v635, %v852
    %v878 = vmul.f32 %v637, %v853
    %v879 = vmul.f32 %v639, %v854
    %v880 = vmul.f32 %v641, %v855
    %v881 = vmul.f32 %v643, %v856
    %v882 = vmul.f32 %v645, %v857
    %v883 = vmul.f32 %v647, %v858
    %v884 = vmul.f32 %v649, %v859
    %v885 = vmul.f32 %v651, %v860
    %v886 = vmul.f32 %v653, %v861
    %v887 = vmul.f32 %v655, %v862
    %v888 = vmul.f32 %v657, %v863
    %v889 = vmul.f32 %v659, %v864
    %v890 = vmul.f32 %v661, %v865
    %v891 = vmul.f32 %v663, %v866
    %v892 = vmul.f32 %v665, %v867
    %v893 = vmul.f32 %v667, %v868
    %v894 = vmul.f32 %v669, %v869
    %v895 = vmul.f32 %v870, %v71
    %v896 = vmul.f32 %v871, %v72
    %v897 = vmul.f32 %v872, %v73
    %v898 = vmul.f32 %v873, %v74
    %v899 = vmul.f32 %v874, %v75
    %v900 = vmul.f32 %v875, %v76
    %v901 = vmul.f32 %v876, %v77
    %v902 = vmul.f32 %v877, %v78
    %v903 = vmul.f32 %v878, %v79
    %v904 = vmul.f32 %v879, %v80
    %v905 = vmul.f32 %v880, %v81
    %v906 = vmul.f32 %v881, %v82
    %v907 = vmul.f32 %v882, %v83
    %v908 = vmul.f32 %v883, %v84
    %v909 = vmul.f32 %v884, %v85
    %v910 = vmul.f32 %v885, %v86
    %v911 = vmul.f32 %v886, %v87
    %v912 = vmul.f32 %v887, %v88
    %v913 = vmul.f32 %v888, %v89
    %v914 = vmul.f32 %v889, %v90
    %v915 = vmul.f32 %v890, %v91
    %v916 = vmul.f32 %v891, %v92
    %v917 = vmul.f32 %v892, %v93
    %v918 = vmul.f32 %v893, %v94
    %v919 = vmul.f32 %v894, %v95
    %v920 = vsub.f32 %v464, %v895
    %v921 = vsub.f32 %v467, %v896
    %v922 = vsub.f32 %v472, %v897
    %v923 = vsub.f32 %v475, %v898
    %v924 = vsub.f32 %v480, %v899
    %v925 = vsub.f32 %v483, %v900
    %v926 = vsub.f32 %v488, %v901
    %v927 = vsub.f32 %v491, %v902
    %v928 = vsub.f32 %v496, %v903
    %v929 = vsub.f32 %v499, %v904
    %v930 = vsub.f32 %v504, %v905
    %v931 = vsub.f32 %v507, %v906
    %v932 = vsub.f32 %v512, %v907
    %v933 = vsub.f32 %v515, %v908
    %v934 = vsub.f32 %v520, %v909
    %v935 = vsub.f32 %v523, %v910
    %v936 = vsub.f32 %v528, %v911
    %v937 = vsub.f32 %v531, %v912
    %v938 = vsub.f32 %v536, %v913
    %v939 = vsub.f32 %v539, %v914
    %v940 = vsub.f32 %v544, %v915
    %v941 = vsub.f32 %v547, %v916
    %v942 = vsub.f32 %v552, %v917
    %v943 = vsub.f32 %v555, %v918
    %v944 = vsub.f32 %v560, %v919
    %v945 = vmax.f32 %v464, 0.0
    %v946 = vmax.f32 %v467, 0.0
    %v947 = vmax.f32 %v472, 0.0
    %v948 = vmax.f32 %v475, 0.0
    %v949 = vmax.f32 %v480, 0.0
    %v950 = vmax.f32 %v483, 0.0
    %v951 = vmax.f32 %v488, 0.0
    %v952 = vmax.f32 %v491, 0.0
    %v953 = vmax.f32 %v496, 0.0
    %v954 = vmax.f32 %v499, 0.0
    %v955 = vmax.f32 %v504, 0.0
    %v956 = vmax.f32 %v507, 0.0
    %v957 = vmax.f32 %v512, 0.0
    %v958 = vmax.f32 %v515, 0.0
    %v959 = vmax.f32 %v520, 0.0
    %v960 = vmax.f32 %v523, 0.0
    %v961 = vmax.f32 %v528, 0.0
    %v962 = vmax.f32 %v531, 0.0
    %v963 = vmax.f32 %v536, 0.0
    %v964 = vmax.f32 %v539, 0.0
    %v965 = vmax.f32 %v544, 0.0
    %v966 = vmax.f32 %v547, 0.0
    %v967 = vmax.f32 %v552, 0.0
    %v968 = vmax.f32 %v555, 0.0
    %v969 = vmax.f32 %v560, 0.0
    %vm970 = vcmp.ne.f32.partialorder %v464, %v464
    %vm971 = vcmp.ne.f32.partialorder %v467, %v467
    %vm972 = vcmp.ne.f32.partialorder %v472, %v472
    %vm973 = vcmp.ne.f32.partialorder %v475, %v475
    %vm974 = vcmp.ne.f32.partialorder %v480, %v480
    %vm975 = vcmp.ne.f32.partialorder %v483, %v483
    %vm976 = vcmp.ne.f32.partialorder %v488, %v488
    %vm977 = vcmp.ne.f32.partialorder %v491, %v491
    %vm978 = vcmp.ne.f32.partialorder %v496, %v496
    %vm979 = vcmp.ne.f32.partialorder %v499, %v499
    %vm980 = vcmp.ne.f32.partialorder %v504, %v504
    %vm981 = vcmp.ne.f32.partialorder %v507, %v507
    %vm982 = vcmp.ne.f32.partialorder %v512, %v512
    %vm983 = vcmp.ne.f32.partialorder %v515, %v515
    %vm984 = vcmp.ne.f32.partialorder %v520, %v520
    %vm985 = vcmp.ne.f32.partialorder %v523, %v523
    %vm986 = vcmp.ne.f32.partialorder %v528, %v528
    %vm987 = vcmp.ne.f32.partialorder %v531, %v531
    %vm988 = vcmp.ne.f32.partialorder %v536, %v536
    %vm989 = vcmp.ne.f32.partialorder %v539, %v539
    %vm990 = vcmp.ne.f32.partialorder %v544, %v544
    %vm991 = vcmp.ne.f32.partialorder %v547, %v547
    %vm992 = vcmp.ne.f32.partialorder %v552, %v552
    %vm993 = vcmp.ne.f32.partialorder %v555, %v555
    %vm994 = vcmp.ne.f32.partialorder %v560, %v560
    %v995 = vadd.f32 %v464, 0.0
    %v996 = vadd.f32 %v467, 0.0
    %v997 = vadd.f32 %v472, 0.0
    %v998 = vadd.f32 %v475, 0.0
    %v999 = vadd.f32 %v480, 0.0
    %v1000 = vadd.f32 %v483, 0.0
    %v1001 = vadd.f32 %v488, 0.0
    %v1002 = vadd.f32 %v491, 0.0
    %v1003 = vadd.f32 %v496, 0.0
    %v1004 = vadd.f32 %v499, 0.0
    %v1005 = vadd.f32 %v504, 0.0
    %v1006 = vadd.f32 %v507, 0.0
    %v1007 = vadd.f32 %v512, 0.0
    %v1008 = vadd.f32 %v515, 0.0
    %v1009 = vadd.f32 %v520, 0.0
    %v1010 = vadd.f32 %v523, 0.0
    %v1011 = vadd.f32 %v528, 0.0
    %v1012 = vadd.f32 %v531, 0.0
    %v1013 = vadd.f32 %v536, 0.0
    %v1014 = vadd.f32 %v539, 0.0
    %v1015 = vadd.f32 %v544, 0.0
    %v1016 = vadd.f32 %v547, 0.0
    %v1017 = vadd.f32 %v552, 0.0
    %v1018 = vadd.f32 %v555, 0.0
    %v1019 = vadd.f32 %v560, 0.0
    %v1020 = vand.u32 2147483647, %v464
    %v1021 = vand.u32 2147483647, %v467
    %v1022 = vand.u32 2147483647, %v472
    %v1023 = vand.u32 2147483647, %v475
    %v1024 = vand.u32 2147483647, %v480
    %v1025 = vand.u32 2147483647, %v483
    %v1026 = vand.u32 2147483647, %v488
    %v1027 = vand.u32 2147483647, %v491
    %v1028 = vand.u32 2147483647, %v496
    %v1029 = vand.u32 2147483647, %v499
    %v1030 = vand.u32 2147483647, %v504
    %v1031 = vand.u32 2147483647, %v507
    %v1032 = vand.u32 2147483647, %v512
    %v1033 = vand.u32 2147483647, %v515
    %v1034 = vand.u32 2147483647, %v520
    %v1035 = vand.u32 2147483647, %v523
    %v1036 = vand.u32 2147483647, %v528
    %v1037 = vand.u32 2147483647, %v531
    %v1038 = vand.u32 2147483647, %v536
    %v1039 = vand.u32 2147483647, %v539
    %v1040 = vand.u32 2147483647, %v544
    %v1041 = vand.u32 2147483647, %v547
    %v1042 = vand.u32 2147483647, %v552
    %v1043 = vand.u32 2147483647, %v555
    %v1044 = vand.u32 2147483647, %v560
    %v1045 = vsub.f32 0.0, %v1020
    %v1046 = vsub.f32 0.0, %v1021
    %v1047 = vsub.f32 0.0, %v1022
    %v1048 = vsub.f32 0.0, %v1023
    %v1049 = vsub.f32 0.0, %v1024
    %v1050 = vsub.f32 0.0, %v1025
    %v1051 = vsub.f32 0.0, %v1026
    %v1052 = vsub.f32 0.0, %v1027
    %v1053 = vsub.f32 0.0, %v1028
    %v1054 = vsub.f32 0.0, %v1029
    %v1055 = vsub.f32 0.0, %v1030
    %v1056 = vsub.f32 0.0, %v1031
    %v1057 = vsub.f32 0.0, %v1032
    %v1058 = vsub.f32 0.0, %v1033
    %v1059 = vsub.f32 0.0, %v1034
    %v1060 = vsub.f32 0.0, %v1035
    %v1061 = vsub.f32 0.0, %v1036
    %v1062 = vsub.f32 0.0, %v1037
    %v1063 = vsub.f32 0.0, %v1038
    %v1064 = vsub.f32 0.0, %v1039
    %v1065 = vsub.f32 0.0, %v1040
    %v1066 = vsub.f32 0.0, %v1041
    %v1067 = vsub.f32 0.0, %v1042
    %v1068 = vsub.f32 0.0, %v1043
    %v1069 = vsub.f32 0.0, %v1044
    %v1070 = vmul.f32 %v1045, 1.442695
    %v1071 = vpow.pop %v1070
    %v1072 = vmul.f32 %v1046, 1.442695
    %v1073 = vpow.pop %v1072
    %v1074 = vmul.f32 %v1047, 1.442695
    %v1075 = vpow.pop %v1074
    %v1076 = vmul.f32 %v1048, 1.442695
    %v1077 = vpow.pop %v1076
    %v1078 = vmul.f32 %v1049, 1.442695
    %v1079 = vpow.pop %v1078
    %v1080 = vmul.f32 %v1050, 1.442695
    %v1081 = vpow.pop %v1080
    %v1082 = vmul.f32 %v1051, 1.442695
    %v1083 = vpow.pop %v1082
    %v1084 = vmul.f32 %v1052, 1.442695
    %v1085 = vpow.pop %v1084
    %v1086 = vmul.f32 %v1053, 1.442695
    %v1087 = vpow.pop %v1086
    %v1088 = vmul.f32 %v1054, 1.442695
    %v1089 = vpow.pop %v1088
    %v1090 = vmul.f32 %v1055, 1.442695
    %v1091 = vpow.pop %v1090
    %v1092 = vmul.f32 %v1056, 1.442695
    %v1093 = vpow.pop %v1092
    %v1094 = vmul.f32 %v1057, 1.442695
    %v1095 = vpow.pop %v1094
    %v1096 = vmul.f32 %v1058, 1.442695
    %v1097 = vpow.pop %v1096
    %v1098 = vmul.f32 %v1059, 1.442695
    %v1099 = vpow.pop %v1098
    %v1100 = vmul.f32 %v1060, 1.442695
    %v1101 = vpow.pop %v1100
    %v1102 = vmul.f32 %v1061, 1.442695
    %v1103 = vpow.pop %v1102
    %v1104 = vmul.f32 %v1062, 1.442695
    %v1105 = vpow.pop %v1104
    %v1106 = vmul.f32 %v1063, 1.442695
    %v1107 = vpow.pop %v1106
    %v1108 = vmul.f32 %v1064, 1.442695
    %v1109 = vpow.pop %v1108
    %v1110 = vmul.f32 %v1065, 1.442695
    %v1111 = vpow.pop %v1110
    %v1112 = vmul.f32 %v1066, 1.442695
    %v1113 = vpow.pop %v1112
    %v1114 = vmul.f32 %v1067, 1.442695
    %v1115 = vpow.pop %v1114
    %v1116 = vmul.f32 %v1068, 1.442695
    %v1117 = vpow.pop %v1116
    %v1118 = vmul.f32 %v1069, 1.442695
    %v1119 = vpow.pop %v1118
    %v1120 = vadd.f32 %v1071, 1.0
    %v1121 = vlog2.pop %v1120
    %v1122 = vmul.f32 %v1121, 0.6931472
    %v1123 = vmul.f32 -0.5, %v1071
    %v1124 = vadd.f32 %v1123, 1.0
    %v1125 = vmul.f32 %v1124, %v1071
    %v1126 = vand.u32 2147483647, %v1071
    %vm1127 = vcmp.lt.f32.partialorder %v1126, 0.0004427343
    %v1128 = vsel %vm1127, %v1125, %v1122
    %v1129 = vadd.f32 %v1073, 1.0
    %v1130 = vlog2.pop %v1129
    %v1131 = vmul.f32 %v1130, 0.6931472
    %v1132 = vmul.f32 -0.5, %v1073
    %v1133 = vadd.f32 %v1132, 1.0
    %v1134 = vmul.f32 %v1133, %v1073
    %v1135 = vand.u32 2147483647, %v1073
    %vm1136 = vcmp.lt.f32.partialorder %v1135, 0.0004427343
    %v1137 = vsel %vm1136, %v1134, %v1131
    %v1138 = vadd.f32 %v1075, 1.0
    %v1139 = vlog2.pop %v1138
    %v1140 = vmul.f32 %v1139, 0.6931472
    %v1141 = vmul.f32 -0.5, %v1075
    %v1142 = vadd.f32 %v1141, 1.0
    %v1143 = vmul.f32 %v1142, %v1075
    %v1144 = vand.u32 2147483647, %v1075
    %vm1145 = vcmp.lt.f32.partialorder %v1144, 0.0004427343
    %v1146 = vsel %vm1145, %v1143, %v1140
    %v1147 = vadd.f32 %v1077, 1.0
    %v1148 = vlog2.pop %v1147
    %v1149 = vmul.f32 %v1148, 0.6931472
    %v1150 = vmul.f32 -0.5, %v1077
    %v1151 = vadd.f32 %v1150, 1.0
    %v1152 = vmul.f32 %v1151, %v1077
    %v1153 = vand.u32 2147483647, %v1077
    %vm1154 = vcmp.lt.f32.partialorder %v1153, 0.0004427343
    %v1155 = vsel %vm1154, %v1152, %v1149
    %v1156 = vadd.f32 %v1079, 1.0
    %v1157 = vlog2.pop %v1156
    %v1158 = vmul.f32 %v1157, 0.6931472
    %v1159 = vmul.f32 -0.5, %v1079
    %v1160 = vadd.f32 %v1159, 1.0
    %v1161 = vmul.f32 %v1160, %v1079
    %v1162 = vand.u32 2147483647, %v1079
    %vm1163 = vcmp.lt.f32.partialorder %v1162, 0.0004427343
    %v1164 = vsel %vm1163, %v1161, %v1158
    %v1165 = vadd.f32 %v1081, 1.0
    %v1166 = vlog2.pop %v1165
    %v1167 = vmul.f32 %v1166, 0.6931472
    %v1168 = vmul.f32 -0.5, %v1081
    %v1169 = vadd.f32 %v1168, 1.0
    %v1170 = vmul.f32 %v1169, %v1081
    %v1171 = vand.u32 2147483647, %v1081
    %vm1172 = vcmp.lt.f32.partialorder %v1171, 0.0004427343
    %v1173 = vsel %vm1172, %v1170, %v1167
    %v1174 = vadd.f32 %v1083, 1.0
    %v1175 = vlog2.pop %v1174
    %v1176 = vmul.f32 %v1175, 0.6931472
    %v1177 = vmul.f32 -0.5, %v1083
    %v1178 = vadd.f32 %v1177, 1.0
    %v1179 = vmul.f32 %v1178, %v1083
    %v1180 = vand.u32 2147483647, %v1083
    %vm1181 = vcmp.lt.f32.partialorder %v1180, 0.0004427343
    %v1182 = vsel %vm1181, %v1179, %v1176
    %v1183 = vadd.f32 %v1085, 1.0
    %v1184 = vlog2.pop %v1183
    %v1185 = vmul.f32 %v1184, 0.6931472
    %v1186 = vmul.f32 -0.5, %v1085
    %v1187 = vadd.f32 %v1186, 1.0
    %v1188 = vmul.f32 %v1187, %v1085
    %v1189 = vand.u32 2147483647, %v1085
    %vm1190 = vcmp.lt.f32.partialorder %v1189, 0.0004427343
    %v1191 = vsel %vm1190, %v1188, %v1185
    %v1192 = vadd.f32 %v1087, 1.0
    %v1193 = vlog2.pop %v1192
    %v1194 = vmul.f32 %v1193, 0.6931472
    %v1195 = vmul.f32 -0.5, %v1087
    %v1196 = vadd.f32 %v1195, 1.0
    %v1197 = vmul.f32 %v1196, %v1087
    %v1198 = vand.u32 2147483647, %v1087
    %vm1199 = vcmp.lt.f32.partialorder %v1198, 0.0004427343
    %v1200 = vsel %vm1199, %v1197, %v1194
    %v1201 = vadd.f32 %v1089, 1.0
    %v1202 = vlog2.pop %v1201
    %v1203 = vmul.f32 %v1202, 0.6931472
    %v1204 = vmul.f32 -0.5, %v1089
    %v1205 = vadd.f32 %v1204, 1.0
    %v1206 = vmul.f32 %v1205, %v1089
    %v1207 = vand.u32 2147483647, %v1089
    %vm1208 = vcmp.lt.f32.partialorder %v1207, 0.0004427343
    %v1209 = vsel %vm1208, %v1206, %v1203
    %v1210 = vadd.f32 %v1091, 1.0
    %v1211 = vlog2.pop %v1210
    %v1212 = vmul.f32 %v1211, 0.6931472
    %v1213 = vmul.f32 -0.5, %v1091
    %v1214 = vadd.f32 %v1213, 1.0
    %v1215 = vmul.f32 %v1214, %v1091
    %v1216 = vand.u32 2147483647, %v1091
    %vm1217 = vcmp.lt.f32.partialorder %v1216, 0.0004427343
    %v1218 = vsel %vm1217, %v1215, %v1212
    %v1219 = vadd.f32 %v1093, 1.0
    %v1220 = vlog2.pop %v1219
    %v1221 = vmul.f32 %v1220, 0.6931472
    %v1222 = vmul.f32 -0.5, %v1093
    %v1223 = vadd.f32 %v1222, 1.0
    %v1224 = vmul.f32 %v1223, %v1093
    %v1225 = vand.u32 2147483647, %v1093
    %vm1226 = vcmp.lt.f32.partialorder %v1225, 0.0004427343
    %v1227 = vsel %vm1226, %v1224, %v1221
    %v1228 = vadd.f32 %v1095, 1.0
    %v1229 = vlog2.pop %v1228
    %v1230 = vmul.f32 %v1229, 0.6931472
    %v1231 = vmul.f32 -0.5, %v1095
    %v1232 = vadd.f32 %v1231, 1.0
    %v1233 = vmul.f32 %v1232, %v1095
    %v1234 = vand.u32 2147483647, %v1095
    %vm1235 = vcmp.lt.f32.partialorder %v1234, 0.0004427343
    %v1236 = vsel %vm1235, %v1233, %v1230
    %v1237 = vadd.f32 %v1097, 1.0
    %v1238 = vlog2.pop %v1237
    %v1239 = vmul.f32 %v1238, 0.6931472
    %v1240 = vmul.f32 -0.5, %v1097
    %v1241 = vadd.f32 %v1240, 1.0
    %v1242 = vmul.f32 %v1241, %v1097
    %v1243 = vand.u32 2147483647, %v1097
    %vm1244 = vcmp.lt.f32.partialorder %v1243, 0.0004427343
    %v1245 = vsel %vm1244, %v1242, %v1239
    %v1246 = vadd.f32 %v1099, 1.0
    %v1247 = vlog2.pop %v1246
    %v1248 = vmul.f32 %v1247, 0.6931472
    %v1249 = vmul.f32 -0.5, %v1099
    %v1250 = vadd.f32 %v1249, 1.0
    %v1251 = vmul.f32 %v1250, %v1099
    %v1252 = vand.u32 2147483647, %v1099
    %vm1253 = vcmp.lt.f32.partialorder %v1252, 0.0004427343
    %v1254 = vsel %vm1253, %v1251, %v1248
    %v1255 = vadd.f32 %v1101, 1.0
    %v1256 = vlog2.pop %v1255
    %v1257 = vmul.f32 %v1256, 0.6931472
    %v1258 = vmul.f32 -0.5, %v1101
    %v1259 = vadd.f32 %v1258, 1.0
    %v1260 = vmul.f32 %v1259, %v1101
    %v1261 = vand.u32 2147483647, %v1101
    %vm1262 = vcmp.lt.f32.partialorder %v1261, 0.0004427343
    %v1263 = vsel %vm1262, %v1260, %v1257
    %v1264 = vadd.f32 %v1103, 1.0
    %v1265 = vlog2.pop %v1264
    %v1266 = vmul.f32 %v1265, 0.6931472
    %v1267 = vmul.f32 -0.5, %v1103
    %v1268 = vadd.f32 %v1267, 1.0
    %v1269 = vmul.f32 %v1268, %v1103
    %v1270 = vand.u32 2147483647, %v1103
    %vm1271 = vcmp.lt.f32.partialorder %v1270, 0.0004427343
    %v1272 = vsel %vm1271, %v1269, %v1266
    %v1273 = vadd.f32 %v1105, 1.0
    %v1274 = vlog2.pop %v1273
    %v1275 = vmul.f32 %v1274, 0.6931472
    %v1276 = vmul.f32 -0.5, %v1105
    %v1277 = vadd.f32 %v1276, 1.0
    %v1278 = vmul.f32 %v1277, %v1105
    %v1279 = vand.u32 2147483647, %v1105
    %vm1280 = vcmp.lt.f32.partialorder %v1279, 0.0004427343
    %v1281 = vsel %vm1280, %v1278, %v1275
    %v1282 = vadd.f32 %v1107, 1.0
    %v1283 = vlog2.pop %v1282
    %v1284 = vmul.f32 %v1283, 0.6931472
    %v1285 = vmul.f32 -0.5, %v1107
    %v1286 = vadd.f32 %v1285, 1.0
    %v1287 = vmul.f32 %v1286, %v1107
    %v1288 = vand.u32 2147483647, %v1107
    %vm1289 = vcmp.lt.f32.partialorder %v1288, 0.0004427343
    %v1290 = vsel %vm1289, %v1287, %v1284
    %v1291 = vadd.f32 %v1109, 1.0
    %v1292 = vlog2.pop %v1291
    %v1293 = vmul.f32 %v1292, 0.6931472
    %v1294 = vmul.f32 -0.5, %v1109
    %v1295 = vadd.f32 %v1294, 1.0
    %v1296 = vmul.f32 %v1295, %v1109
    %v1297 = vand.u32 2147483647, %v1109
    %vm1298 = vcmp.lt.f32.partialorder %v1297, 0.0004427343
    %v1299 = vsel %vm1298, %v1296, %v1293
    %v1300 = vadd.f32 %v1111, 1.0
    %v1301 = vlog2.pop %v1300
    %v1302 = vmul.f32 %v1301, 0.6931472
    %v1303 = vmul.f32 -0.5, %v1111
    %v1304 = vadd.f32 %v1303, 1.0
    %v1305 = vmul.f32 %v1304, %v1111
    %v1306 = vand.u32 2147483647, %v1111
    %vm1307 = vcmp.lt.f32.partialorder %v1306, 0.0004427343
    %v1308 = vsel %vm1307, %v1305, %v1302
    %v1309 = vadd.f32 %v1113, 1.0
    %v1310 = vlog2.pop %v1309
    %v1311 = vmul.f32 %v1310, 0.6931472
    %v1312 = vmul.f32 -0.5, %v1113
    %v1313 = vadd.f32 %v1312, 1.0
    %v1314 = vmul.f32 %v1313, %v1113
    %v1315 = vand.u32 2147483647, %v1113
    %vm1316 = vcmp.lt.f32.partialorder %v1315, 0.0004427343
    %v1317 = vsel %vm1316, %v1314, %v1311
    %v1318 = vadd.f32 %v1115, 1.0
    %v1319 = vlog2.pop %v1318
    %v1320 = vmul.f32 %v1319, 0.6931472
    %v1321 = vmul.f32 -0.5, %v1115
    %v1322 = vadd.f32 %v1321, 1.0
    %v1323 = vmul.f32 %v1322, %v1115
    %v1324 = vand.u32 2147483647, %v1115
    %vm1325 = vcmp.lt.f32.partialorder %v1324, 0.0004427343
    %v1326 = vsel %vm1325, %v1323, %v1320
    %v1327 = vadd.f32 %v1117, 1.0
    %v1328 = vlog2.pop %v1327
    %v1329 = vmul.f32 %v1328, 0.6931472
    %v1330 = vmul.f32 -0.5, %v1117
    %v1331 = vadd.f32 %v1330, 1.0
    %v1332 = vmul.f32 %v1331, %v1117
    %v1333 = vand.u32 2147483647, %v1117
    %vm1334 = vcmp.lt.f32.partialorder %v1333, 0.0004427343
    %v1335 = vsel %vm1334, %v1332, %v1329
    %v1336 = vadd.f32 %v1119, 1.0
    %v1337 = vlog2.pop %v1336
    %v1338 = vmul.f32 %v1337, 0.6931472
    %v1339 = vmul.f32 -0.5, %v1119
    %v1340 = vadd.f32 %v1339, 1.0
    %v1341 = vmul.f32 %v1340, %v1119
    %v1342 = vand.u32 2147483647, %v1119
    %vm1343 = vcmp.lt.f32.partialorder %v1342, 0.0004427343
    %v1344 = vsel %vm1343, %v1341, %v1338
    %v1345 = vadd.f32 %v945, %v1128
    %v1346 = vadd.f32 %v946, %v1137
    %v1347 = vadd.f32 %v947, %v1146
    %v1348 = vadd.f32 %v948, %v1155
    %v1349 = vadd.f32 %v949, %v1164
    %v1350 = vadd.f32 %v950, %v1173
    %v1351 = vadd.f32 %v951, %v1182
    %v1352 = vadd.f32 %v952, %v1191
    %v1353 = vadd.f32 %v953, %v1200
    %v1354 = vadd.f32 %v954, %v1209
    %v1355 = vadd.f32 %v955, %v1218
    %v1356 = vadd.f32 %v956, %v1227
    %v1357 = vadd.f32 %v957, %v1236
    %v1358 = vadd.f32 %v958, %v1245
    %v1359 = vadd.f32 %v959, %v1254
    %v1360 = vadd.f32 %v960, %v1263
    %v1361 = vadd.f32 %v961, %v1272
    %v1362 = vadd.f32 %v962, %v1281
    %v1363 = vadd.f32 %v963, %v1290
    %v1364 = vadd.f32 %v964, %v1299
    %v1365 = vadd.f32 %v965, %v1308
    %v1366 = vadd.f32 %v966, %v1317
    %v1367 = vadd.f32 %v967, %v1326
    %v1368 = vadd.f32 %v968, %v1335
    %v1369 = vadd.f32 %v969, %v1344
    %v1370 = vsel %vm970, %v995, %v1345
    %v1371 = vsel %vm971, %v996, %v1346
    %v1372 = vsel %vm972, %v997, %v1347
    %v1373 = vsel %vm973, %v998, %v1348
    %v1374 = vsel %vm974, %v999, %v1349
    %v1375 = vsel %vm975, %v1000, %v1350
    %v1376 = vsel %vm976, %v1001, %v1351
    %v1377 = vsel %vm977, %v1002, %v1352
    %v1378 = vsel %vm978, %v1003, %v1353
    %v1379 = vsel %vm979, %v1004, %v1354
    %v1380 = vsel %vm980, %v1005, %v1355
    %v1381 = vsel %vm981, %v1006, %v1356
    %v1382 = vsel %vm982, %v1007, %v1357
    %v1383 = vsel %vm983, %v1008, %v1358
    %v1384 = vsel %vm984, %v1009, %v1359
    %v1385 = vsel %vm985, %v1010, %v1360
    %v1386 = vsel %vm986, %v1011, %v1361
    %v1387 = vsel %vm987, %v1012, %v1362
    %v1388 = vsel %vm988, %v1013, %v1363
    %v1389 = vsel %vm989, %v1014, %v1364
    %v1390 = vsel %vm990, %v1015, %v1365
    %v1391 = vsel %vm991, %v1016, %v1366
    %v1392 = vsel %vm992, %v1017, %v1367
    %v1393 = vsel %vm993, %v1018, %v1368
    %v1394 = vsel %vm994, %v1019, %v1369
    %v1395 = vsub.f32 0.0, %v1370
    %v1396 = vsub.f32 0.0, %v1371
    %v1397 = vsub.f32 0.0, %v1372
    %v1398 = vsub.f32 0.0, %v1373
    %v1399 = vsub.f32 0.0, %v1374
    %v1400 = vsub.f32 0.0, %v1375
    %v1401 = vsub.f32 0.0, %v1376
    %v1402 = vsub.f32 0.0, %v1377
    %v1403 = vsub.f32 0.0, %v1378
    %v1404 = vsub.f32 0.0, %v1379
    %v1405 = vsub.f32 0.0, %v1380
    %v1406 = vsub.f32 0.0, %v1381
    %v1407 = vsub.f32 0.0, %v1382
    %v1408 = vsub.f32 0.0, %v1383
    %v1409 = vsub.f32 0.0, %v1384
    %v1410 = vsub.f32 0.0, %v1385
    %v1411 = vsub.f32 0.0, %v1386
    %v1412 = vsub.f32 0.0, %v1387
    %v1413 = vsub.f32 0.0, %v1388
    %v1414 = vsub.f32 0.0, %v1389
    %v1415 = vsub.f32 0.0, %v1390
    %v1416 = vsub.f32 0.0, %v1391
    %v1417 = vsub.f32 0.0, %v1392
    %v1418 = vsub.f32 0.0, %v1393
    %v1419 = vsub.f32 0.0, %v1394
    %v1420 = vmul.f32 %v1395, %v71
    %v1421 = vmul.f32 %v1396, %v72
    %v1422 = vmul.f32 %v1397, %v73
    %v1423 = vmul.f32 %v1398, %v74
    %v1424 = vmul.f32 %v1399, %v75
    %v1425 = vmul.f32 %v1400, %v76
    %v1426 = vmul.f32 %v1401, %v77
    %v1427 = vmul.f32 %v1402, %v78
    %v1428 = vmul.f32 %v1403, %v79
    %v1429 = vmul.f32 %v1404, %v80
    %v1430 = vmul.f32 %v1405, %v81
    %v1431 = vmul.f32 %v1406, %v82
    %v1432 = vmul.f32 %v1407, %v83
    %v1433 = vmul.f32 %v1408, %v84
    %v1434 = vmul.f32 %v1409, %v85
    %v1435 = vmul.f32 %v1410, %v86
    %v1436 = vmul.f32 %v1411, %v87
    %v1437 = vmul.f32 %v1412, %v88
    %v1438 = vmul.f32 %v1413, %v89
    %v1439 = vmul.f32 %v1414, %v90
    %v1440 = vmul.f32 %v1415, %v91
    %v1441 = vmul.f32 %v1416, %v92
    %v1442 = vmul.f32 %v1417, %v93
    %v1443 = vmul.f32 %v1418, %v94
    %v1444 = vmul.f32 %v1419, %v95
    %v1445 = vsel %vm569, %v920, %v1420
    %v1446 = vsel %vm569, %v921, %v1421
    %v1447 = vsel %vm569, %v922, %v1422
    %v1448 = vsel %vm569, %v923, %v1423
    %v1449 = vsel %vm569, %v924, %v1424
    %v1450 = vsel %vm569, %v925, %v1425
    %v1451 = vsel %vm569, %v926, %v1426
    %v1452 = vsel %vm569, %v927, %v1427
    %v1453 = vsel %vm569, %v928, %v1428
    %v1454 = vsel %vm569, %v929, %v1429
    %v1455 = vsel %vm569, %v930, %v1430
    %v1456 = vsel %vm569, %v931, %v1431
    %v1457 = vsel %vm569, %v932, %v1432
    %v1458 = vsel %vm569, %v933, %v1433
    %v1459 = vsel %vm569, %v934, %v1434
    %v1460 = vsel %vm569, %v935, %v1435
    %v1461 = vsel %vm569, %v936, %v1436
    %v1462 = vsel %vm569, %v937, %v1437
    %v1463 = vsel %vm569, %v938, %v1438
    %v1464 = vsel %vm569, %v939, %v1439
    %v1465 = vsel %vm569, %v940, %v1440
    %v1466 = vsel %vm569, %v941, %v1441
    %v1467 = vsel %vm569, %v942, %v1442
    %v1468 = vsel %vm569, %v943, %v1443
    %v1469 = vsel %vm569, %v944, %v1444
    %1470 = vst [vmem:[#allocation9] sm:$0xff] %v1445
    %1471 = vst [vmem:[#allocation9 + $0x8] sm:$0xff] %v1446
    %1472 = vst [vmem:[#allocation9 + $0x10] sm:$0xff] %v1447
    %1473 = vst [vmem:[#allocation9 + $0x18] sm:$0xff] %v1448
    %1474 = vst [vmem:[#allocation9 + $0x20] sm:$0xff] %v1449
    %1475 = vst [vmem:[#allocation9 + $0x28] sm:$0xff] %v1450
    %1476 = vst [vmem:[#allocation9 + $0x30] sm:$0xff] %v1451
    %1477 = vst [vmem:[#allocation9 + $0x38] sm:$0xff] %v1452
    %1478 = vst [vmem:[#allocation9 + $0x40] sm:$0xff] %v1453
    %1479 = vst [vmem:[#allocation9 + $0x48] sm:$0xff] %v1454
    %1480 = vst [vmem:[#allocation9 + $0x50] sm:$0xff] %v1455
    %1481 = vst [vmem:[#allocation9 + $0x58] sm:$0xff] %v1456
    %1482 = vst [vmem:[#allocation9 + $0x60] sm:$0xff] %v1457
    %1483 = vst [vmem:[#allocation9 + $0x68] sm:$0xff] %v1458
    %1484 = vst [vmem:[#allocation9 + $0x70] sm:$0xff] %v1459
    %1485 = vst [vmem:[#allocation9 + $0x78] sm:$0xff] %v1460
    %1486 = vst [vmem:[#allocation9 + $0x80] sm:$0xff] %v1461
    %1487 = vst [vmem:[#allocation9 + $0x88] sm:$0xff] %v1462
    %1488 = vst [vmem:[#allocation9 + $0x90] sm:$0xff] %v1463
    %1489 = vst [vmem:[#allocation9 + $0x98] sm:$0xff] %v1464
    %1490 = vst [vmem:[#allocation9 + $0xa0] sm:$0xff] %v1465
    %1491 = vst [vmem:[#allocation9 + $0xa8] sm:$0xff] %v1466
    %1492 = vst [vmem:[#allocation9 + $0xb0] sm:$0xff] %v1467
    %1493 = vst [vmem:[#allocation9 + $0xb8] sm:$0xff] %v1468
    %1494 = vst [vmem:[#allocation9 + $0xc0] sm:$0xff] %v1469
    // Predicated region
    $region42: #{tpu_custom_call.1} parent=1 // pred_check
      _
    $region43: #{tpu_custom_call.1} parent=1 // pred_check_branch
      %1496 = sbr.rel (0) target = $region45
    $region44: #{tpu_custom_call.1} parent=1 // pred_region
      %s1498 = ssub.s32 3200, 3200
      %1499 = vsyncadd [#allocation5], %s1498
      %s1500 = sshll.u32 [#allocation9], 4
      %s1501 = int_to_ptr.vmem [resolvable:$true] %s1500
      %1506 = dma.vmem_to_hbm [thread:$0]  %s1501, 3200, %s7, [#allocation5], 128, 128, 8
    $region45: #{tpu_custom_call.1} parent=1 // pred_fallthru
      _
    // Predicated region
    $region46: #{tpu_custom_call.1} parent=1 // pred_check
      _
    $region47: #{tpu_custom_call.1} parent=1 // pred_check_branch
      %1508 = sbr.rel (0) target = $region49
    $region48: #{tpu_custom_call.1} parent=1 // pred_region
      %1509 = dma.done [#allocation5], 3200
    $region49: #{tpu_custom_call.1} parent=1 // pred_fallthru
      _
    %1510 = vsyncpa [#allocation4], 1
    %1511 = vsyncpa [#allocation7], 1
    %1512 = vsyncpa [#allocation5], 1

</llo_original>
